<compile_context>
chip_gen: v7x
topology: tpu7x:2x2x1
jax: 0.10.0
libtpu: 0.0.40
codegen_flags: <defaults>
</compile_context>

<pallas_src>
import functools

import jax
import jax.numpy as jnp
from jax.experimental import pallas as pl
from jax.experimental.pallas import tpu as pltpu


def _round_up(x, m):
    return (x + m - 1) // m * m


def _tpu_hw_info():
    """(physical VMEM bytes, is_v5) with conservative fallbacks."""
    vmem_cap = 64 << 20                     # v7x physical; v5e/v6e have 128 MiB
    try:
        vmem_cap = int(pltpu.get_tpu_info().vmem_capacity_bytes)
    except Exception:
        pass
    kind = ""
    try:
        kind = jax.devices()[0].device_kind.lower()
    except Exception:
        pass
    return vmem_cap, ("v5" in kind)


def _pick_batch_tile(B, T_out, K, F_pad, C_pad, vmem_cap, is_v5, tb):
    """VMEM-budget-aware batch tile + explicit vmem limit for the kernel."""
    resident = (K * F_pad * 2 + F_pad * 4 + T_out * F_pad * 4
                + F_pad * C_pad * 2 + C_pad * 4)        # grid-invariant operands

    def footprint(t):
        x_tile = 2 * t * T_out * K * 2                  # double-buffered bf16 x
        out_tile = 2 * t * C_pad * 4                    # double-buffered f32 out
        temps = 3 * t * T_out * F_pad * 4               # f32 acc + masked temps
        return x_tile + out_tile + temps

    if tb is not None:
        assert B % tb == 0, "manual batch tile must divide the batch"
        t = tb
    else:
        budget = int(0.40 * vmem_cap)
        cap = 64 if is_v5 else 256                      # v5e: keep tiles modest
        cands = [c for c in (256, 128, 64, 32, 16, 8) if c <= cap and B % c == 0]
        t = None
        # First pass insists on >= 2 grid steps (v7x dual-TC, DMA overlap).
        for want_multi_step in (True, False):
            for c in cands:
                if want_multi_step and B // c < 2:
                    continue
                if resident + footprint(c) <= budget:
                    t = c
                    break
            if t is not None:
                break
        if t is None:
            small = [c for c in (8, 16, 32, 64, 128, 256) if B % c == 0]
            t = small[0] if small else B

    vmem_limit = int(min(vmem_cap,
                         max(32 << 20, resident + footprint(t) + (4 << 20))))
    return t, vmem_limit


def _make_kernel(TB, T_out, K, F_pad):
    """Kernel closure for fixed static shapes; processes one batch tile."""

    def kernel(x_ref, w_ref, b_ref, m_ref, wo_ref, bo_ref, out_ref):
        # x_ref : (TB, T_out, K)   bf16  im2col activations (K = s_max*D)
        # w_ref : (K, F_pad)       bf16  fused conv weight (taps in rows)
        # b_ref : (1, F_pad)       f32   fused conv bias
        # m_ref : (T_out, F_pad)   f32   per-branch valid-time mask (0/1)
        # wo_ref: (F_pad, C_pad)   bf16  classifier weight (pre-transposed)
        # bo_ref: (1, C_pad)       f32
        # out_ref: (TB, C_pad)     f32
        x = x_ref[...].reshape(TB * T_out, K)

        # Single deep-K MXU matmul: all kernel sizes and taps fused.
        acc = jnp.dot(x, w_ref[...], preferred_element_type=jnp.float32)

        # Bias + ReLU in f32 (VPU); zero invalid time positions (exact since
        # post-ReLU values are >= 0), then max-pool over time.
        acc = jnp.maximum(acc + b_ref[...], 0.0)
        acc = acc.reshape(TB, T_out, F_pad) * m_ref[...]
        feat = jnp.max(acc, axis=1)                         # (TB, F_pad)

        # dropout: eval-mode semantics (identity).
        # TODO(synk): training-mode dropout (Bernoulli mask via pltpu.prng_*).

        logits = jnp.dot(feat.astype(jnp.bfloat16), wo_ref[...],
                         preferred_element_type=jnp.float32) + bo_ref[...]
        out_ref[...] = logits.astype(out_ref.dtype)

    return kernel


def make_textcnn_forward(embedding_matrix, conv_ws, conv_bs, w_out, b_out,
                         kernel_sizes, features, class_num, tb=None):
    """Fuse / pad parameters ONCE and return a jitted forward(token_ids)."""
    vocab, D = embedding_matrix.shape
    s_max = max(kernel_sizes)
    K = s_max * D
    F_total = sum(features)
    F_pad = max(128, _round_up(F_total, 128))
    C_pad = max(128, _round_up(class_num, 128))

    # ---- one-time weight fusion (im2col row layout: row = tap*D + d) ----
    w2 = jnp.zeros((K, F_pad), jnp.float32)
    b2 = jnp.zeros((1, F_pad), jnp.float32)
    col = 0
    col_info = []                                   # (col_start, width, size)
    for w, b, s, f in zip(conv_ws, conv_bs, kernel_sizes, features):
        wt = jnp.transpose(w, (1, 2, 0)).reshape(s * D, f)   # (s*D, f)
        base = (s_max - s) * D                      # right-align branch taps
        w2 = w2.at[base:base + s * D, col:col + f].set(wt)
        b2 = b2.at[0, col:col + f].set(b)
        col_info.append((col, f, s))
        col += f

    wo = jnp.zeros((F_pad, C_pad), jnp.float32)
    wo = wo.at[:F_total, :class_num].set(w_out.T)   # pre-transposed classifier
    bo = jnp.zeros((1, C_pad), jnp.float32)
    bo = bo.at[0, :class_num].set(b_out)

    # Extra all-zero embedding row so sequence padding folds into the gather.
    emb_ext = jnp.concatenate(
        [embedding_matrix, jnp.zeros((1, D), embedding_matrix.dtype)], axis=0
    ).astype(jnp.bfloat16)

    w2 = w2.astype(jnp.bfloat16)
    wo = wo.astype(jnp.bfloat16)

    vmem_cap, is_v5 = _tpu_hw_info()

    def _apply(token_ids, *, single_buffer):
        B, L = token_ids.shape
        T_out = _round_up(L + s_max - 1, 16)        # shared, aligned time grid
        P = s_max - 1

        # Per-branch valid-length mask (built from constants at trace time).
        mask = jnp.zeros((T_out, F_pad), jnp.float32)
        rows = jnp.arange(T_out)[:, None]
        for c0, f, s in col_info:
            valid = (rows < (L + s - 1)).astype(jnp.float32)
            mask = mask.at[:, c0:c0 + f].set(jnp.broadcast_to(valid, (T_out, f)))

        # im2col gather: x_col[b, t, k*D + d] = emb[ids_pad[b, t + k], d]
        ids_pad = jnp.pad(token_ids, ((0, 0), (P, T_out - L)),
                          constant_values=vocab)     # length T_out + s_max - 1
        pos = jnp.arange(T_out)[:, None] + jnp.arange(s_max)[None, :]
        x_col = emb_ext[ids_pad[:, pos]].reshape(B, T_out, K)   # (B,T_out,K) bf16

        TB, vmem_limit = _pick_batch_tile(B, T_out, K, F_pad, C_pad,
                                          vmem_cap, is_v5, tb)
        kernel = _make_kernel(TB, T_out, K, F_pad)

        # Grid-invariant operands: DMA'd once; single pipeline buffer saves VMEM.
        const_kw = {"pipeline_mode": pl.Buffered(1)} if single_buffer else {}
        grid_spec = pltpu.PrefetchScalarGridSpec(
            num_scalar_prefetch=0,
            grid=(B // TB,),
            in_specs=[
                pl.BlockSpec((TB, T_out, K), lambda i: (i, 0, 0)),     # batch-tiled
                pl.BlockSpec((K, F_pad), lambda i: (0, 0), **const_kw),
                pl.BlockSpec((1, F_pad), lambda i: (0, 0), **const_kw),
                pl.BlockSpec((T_out, F_pad), lambda i: (0, 0), **const_kw),
                pl.BlockSpec((F_pad, C_pad), lambda i: (0, 0), **const_kw),
                pl.BlockSpec((1, C_pad), lambda i: (0, 0), **const_kw),
            ],
            out_specs=pl.BlockSpec((TB, C_pad), lambda i: (i, 0)),     # lane-dense
        )

        out = pl.pallas_call(
            kernel,
            out_shape=jax.ShapeDtypeStruct((B, C_pad), jnp.float32),
            grid_spec=grid_spec,
            compiler_params=pltpu.CompilerParams(
                dimension_semantics=("parallel",),   # megacore / v7x dual-TC
                vmem_limit_bytes=vmem_limit),
        )(x_col, w2, b2, mask, wo, bo)
        return out[:, :class_num]

    fwd_single = jax.jit(functools.partial(_apply, single_buffer=True))
    fwd_double = jax.jit(functools.partial(_apply, single_buffer=False))
    state = {"fn": None}

    def forward(token_ids):
        if state["fn"] is None:
            try:
                res = fwd_single(token_ids)
                jax.block_until_ready(res)
                state["fn"] = fwd_single
                return res
            except Exception:
                # pipeline_mode=Buffered(1) unsupported -> default double buffering
                state["fn"] = fwd_double
        return state["fn"](token_ids)

    return forward


def textcnn_reference(token_ids, embedding_matrix, conv_ws, conv_bs,
                      w_out, b_out, kernel_sizes):
    """Pure-JAX f32 reference matching the PyTorch forward (eval mode)."""
    B, L = token_ids.shape
    emb = embedding_matrix[token_ids]                              # (B, L, D)
    feats = []
    for w, b, s in zip(conv_ws, conv_bs, kernel_sizes):
        T = L + s - 1
        xp = jnp.pad(emb, ((0, 0), (s - 1, s - 1), (0, 0)))
        cols = []
        for t in range(T):
            win = xp[:, t:t + s, :]                                # (B, s, D)
            cols.append(jnp.einsum('bsd,fsd->bf', win, w) + b)
        conv = jnp.maximum(jnp.stack(cols, axis=1), 0.0)           # (B, T, F_s)
        feats.append(jnp.max(conv, axis=1))
    feat = jnp.concatenate(feats, axis=1)
    return feat @ w_out.T + b_out


if __name__ == "__main__":
    # small, deterministic configuration
    B, L = 16, 16
    vec_dim = 32
    vocab_size = 20
    kernel_sizes = (3, 4, 5)
    features = (8, 8, 8)
    class_num = 4

    key = jax.random.PRNGKey(0)
    k_emb, k_ids, k_out_w, k_out_b, *k_convs = jax.random.split(
        key, 5 + 2 * len(kernel_sizes))

    embedding_matrix = jax.random.normal(k_emb, (vocab_size, vec_dim), jnp.float32) * 0.1
    token_ids = jax.random.randint(k_ids, (B, L), 0, vocab_size, dtype=jnp.int32)

    conv_ws, conv_bs = [], []
    for i, (s, f) in enumerate(zip(kernel_sizes, features)):
        conv_ws.append(jax.random.normal(k_convs[2 * i], (f, s, vec_dim), jnp.float32) * 0.1)
        conv_bs.append(jax.random.normal(k_convs[2 * i + 1], (f,), jnp.float32) * 0.1)

    w_out = jax.random.normal(k_out_w, (class_num, sum(features)), jnp.float32) * 0.1
    b_out = jax.random.normal(k_out_b, (class_num,), jnp.float32) * 0.1

    forward = make_textcnn_forward(embedding_matrix, conv_ws, conv_bs,
                                   w_out, b_out, kernel_sizes, features,
                                   class_num)          # auto TB (grid >= 2 steps)
    out = forward(token_ids)
    out = jax.block_until_ready(out)

    ref = textcnn_reference(token_ids, embedding_matrix, conv_ws, conv_bs,
                            w_out, b_out, kernel_sizes)

    assert out.shape == (B, class_num)
    # bf16 matmul inputs (f32 accumulation) -> relaxed tolerance vs f32 reference
    assert jnp.allclose(out, ref, atol=3e-2, rtol=3e-2), (out, ref)
    print("KERNEL_OK")
</pallas_src>

<mosaic_0001>
module attributes {stable_mosaic.version = 11 : i64} {
  func.func @kernel(%arg0: i32, %arg1: memref<8x32x160xbf16, #tpu.memory_space<vmem>>, %arg2: memref<160x128xbf16, #tpu.memory_space<vmem>>, %arg3: memref<1x128xf32, #tpu.memory_space<vmem>>, %arg4: memref<32x128xf32, #tpu.memory_space<vmem>>, %arg5: memref<128x128xbf16, #tpu.memory_space<vmem>>, %arg6: memref<1x128xf32, #tpu.memory_space<vmem>>, %arg7: memref<8x128xf32, #tpu.memory_space<vmem>>) attributes {dimension_semantics = [#tpu.dimension_semantics<parallel>], iteration_bounds = array<i64: 2>, scalar_prefetch = 0 : i64, scratch_operands = 0 : i64, tpu.core_type = #tpu.core_type<tc>, window_params = [{transform_indices = @transform_0, window_bounds = array<i64: 8, 32, 160>}, {pipeline_mode = #tpu.pipeline_mode<synchronous>, transform_indices = @transform_1, window_bounds = array<i64: 160, 128>}, {pipeline_mode = #tpu.pipeline_mode<synchronous>, transform_indices = @transform_2, window_bounds = array<i64: 1, 128>}, {pipeline_mode = #tpu.pipeline_mode<synchronous>, transform_indices = @transform_3, window_bounds = array<i64: 32, 128>}, {pipeline_mode = #tpu.pipeline_mode<synchronous>, transform_indices = @transform_4, window_bounds = array<i64: 128, 128>}, {pipeline_mode = #tpu.pipeline_mode<synchronous>, transform_indices = @transform_5, window_bounds = array<i64: 1, 128>}, {transform_indices = @transform_6, window_bounds = array<i64: 8, 128>}]} {
    %c0 = arith.constant 0 : index
    %c0_0 = arith.constant 0 : index
    %c0_1 = arith.constant 0 : index
    %0 = vector.load %arg1[%c0, %c0_0, %c0_1] : memref<8x32x160xbf16, #tpu.memory_space<vmem>>, vector<8x32x160xbf16>
    %1 = vector.shape_cast %0 : vector<8x32x160xbf16> to vector<256x160xbf16>
    %c0_2 = arith.constant 0 : index
    %c0_3 = arith.constant 0 : index
    %2 = vector.load %arg2[%c0_2, %c0_3] : memref<160x128xbf16, #tpu.memory_space<vmem>>, vector<160x128xbf16>
    %cst = arith.constant dense<0.000000e+00> : vector<256x128xf32>
    %3 = tpu.matmul %1, %2, %cst {dimension_numbers = #tpu.dot_dimension_numbers<[1], [0], [0], [1], [0, 0, 1, 1], [], []>} : vector<256x160xbf16>, vector<160x128xbf16>, vector<256x128xf32> -> vector<256x128xf32>
    %c0_4 = arith.constant 0 : index
    %c0_5 = arith.constant 0 : index
    %4 = vector.load %arg3[%c0_4, %c0_5] : memref<1x128xf32, #tpu.memory_space<vmem>>, vector<1x128xf32>
    %5 = vector.broadcast %4 : vector<1x128xf32> to vector<256x128xf32>
    %6 = arith.addf %3, %5 : vector<256x128xf32>
    %cst_6 = arith.constant 0.000000e+00 : f32
    %7 = vector.broadcast %cst_6 : f32 to vector<256x128xf32>
    %8 = arith.maximumf %6, %7 : vector<256x128xf32>
    %9 = vector.shape_cast %8 : vector<256x128xf32> to vector<8x32x128xf32>
    %c0_7 = arith.constant 0 : index
    %c0_8 = arith.constant 0 : index
    %10 = vector.load %arg4[%c0_7, %c0_8] : memref<32x128xf32, #tpu.memory_space<vmem>>, vector<32x128xf32>
    %11 = vector.shape_cast %10 : vector<32x128xf32> to vector<1x32x128xf32>
    %12 = vector.broadcast %11 : vector<1x32x128xf32> to vector<8x32x128xf32>
    %13 = arith.mulf %9, %12 : vector<8x32x128xf32>
    %cst_9 = arith.constant dense<0xFF800000> : vector<8x128xf32>
    %14 = vector.multi_reduction <maximumf>, %13, %cst_9 [1] : vector<8x32x128xf32> to vector<8x128xf32>
    %15 = arith.truncf %14 : vector<8x128xf32> to vector<8x128xbf16>
    %c0_10 = arith.constant 0 : index
    %c0_11 = arith.constant 0 : index
    %16 = vector.load %arg5[%c0_10, %c0_11] : memref<128x128xbf16, #tpu.memory_space<vmem>>, vector<128x128xbf16>
    %cst_12 = arith.constant dense<0.000000e+00> : vector<8x128xf32>
    %17 = tpu.matmul %15, %16, %cst_12 {dimension_numbers = #tpu.dot_dimension_numbers<[1], [0], [0], [1], [0, 0, 1, 1], [], []>} : vector<8x128xbf16>, vector<128x128xbf16>, vector<8x128xf32> -> vector<8x128xf32>
    %c0_13 = arith.constant 0 : index
    %c0_14 = arith.constant 0 : index
    %18 = vector.load %arg6[%c0_13, %c0_14] : memref<1x128xf32, #tpu.memory_space<vmem>>, vector<1x128xf32>
    %19 = vector.broadcast %18 : vector<1x128xf32> to vector<8x128xf32>
    %20 = arith.addf %17, %19 : vector<8x128xf32>
    %c0_15 = arith.constant 0 : index
    %c0_16 = arith.constant 0 : index
    %21 = vector.load %arg7[%c0_15, %c0_16] : memref<8x128xf32, #tpu.memory_space<vmem>>, vector<8x128xf32>
    tpu.vector_store %arg7[%c0_15, %c0_16], %20 {strides = array<i32>} : memref<8x128xf32, #tpu.memory_space<vmem>>, vector<8x128xf32>,
    return
  }
  func.func @transform_0(%arg0: i32) -> (i32, i32, i32) {
    %c0_i32 = arith.constant 0 : i32
    %c0_i32_0 = arith.constant 0 : i32
    %c0_i32_1 = arith.constant 0 : i32
    return %arg0, %c0_i32, %c0_i32_0 : i32, i32, i32
  }
  func.func @transform_1(%arg0: i32) -> (i32, i32) {
    %c0_i32 = arith.constant 0 : i32
    %c0_i32_0 = arith.constant 0 : i32
    %c0_i32_1 = arith.constant 0 : i32
    return %c0_i32, %c0_i32_0 : i32, i32
  }
  func.func @transform_2(%arg0: i32) -> (i32, i32) {
    %c0_i32 = arith.constant 0 : i32
    %c0_i32_0 = arith.constant 0 : i32
    %c0_i32_1 = arith.constant 0 : i32
    return %c0_i32, %c0_i32_0 : i32, i32
  }
  func.func @transform_3(%arg0: i32) -> (i32, i32) {
    %c0_i32 = arith.constant 0 : i32
    %c0_i32_0 = arith.constant 0 : i32
    %c0_i32_1 = arith.constant 0 : i32
    return %c0_i32, %c0_i32_0 : i32, i32
  }
  func.func @transform_4(%arg0: i32) -> (i32, i32) {
    %c0_i32 = arith.constant 0 : i32
    %c0_i32_0 = arith.constant 0 : i32
    %c0_i32_1 = arith.constant 0 : i32
    return %c0_i32, %c0_i32_0 : i32, i32
  }
  func.func @transform_5(%arg0: i32) -> (i32, i32) {
    %c0_i32 = arith.constant 0 : i32
    %c0_i32_0 = arith.constant 0 : i32
    %c0_i32_1 = arith.constant 0 : i32
    return %c0_i32, %c0_i32_0 : i32, i32
  }
  func.func @transform_6(%arg0: i32) -> (i32, i32) {
    %c0_i32 = arith.constant 0 : i32
    %c0_i32_0 = arith.constant 0 : i32
    return %arg0, %c0_i32 : i32, i32
  }
}

module attributes {stable_mosaic.version = 11 : i64} {
  func.func @kernel(%arg0: i32, %arg1: memref<8x32x160xbf16, #tpu.memory_space<vmem>>, %arg2: memref<160x128xbf16, #tpu.memory_space<vmem>>, %arg3: memref<1x128xf32, #tpu.memory_space<vmem>>, %arg4: memref<32x128xf32, #tpu.memory_space<vmem>>, %arg5: memref<128x128xbf16, #tpu.memory_space<vmem>>, %arg6: memref<1x128xf32, #tpu.memory_space<vmem>>, %arg7: memref<8x128xf32, #tpu.memory_space<vmem>>) attributes {dimension_semantics = [#tpu.dimension_semantics<parallel>], iteration_bounds = array<i64: 2>, scalar_prefetch = 0 : i64, scratch_operands = 0 : i64, tpu.core_type = #tpu.core_type<tc>, window_params = [{transform_indices = @transform_0, window_bounds = array<i64: 8, 32, 160>}, {pipeline_mode = #tpu.pipeline_mode<synchronous>, transform_indices = @transform_1, window_bounds = array<i64: 160, 128>}, {pipeline_mode = #tpu.pipeline_mode<synchronous>, transform_indices = @transform_2, window_bounds = array<i64: 1, 128>}, {pipeline_mode = #tpu.pipeline_mode<synchronous>, transform_indices = @transform_3, window_bounds = array<i64: 32, 128>}, {pipeline_mode = #tpu.pipeline_mode<synchronous>, transform_indices = @transform_4, window_bounds = array<i64: 128, 128>}, {pipeline_mode = #tpu.pipeline_mode<synchronous>, transform_indices = @transform_5, window_bounds = array<i64: 1, 128>}, {transform_indices = @transform_6, window_bounds = array<i64: 8, 128>}]} {
    %c0 = arith.constant 0 : index
    %c0_0 = arith.constant 0 : index
    %c0_1 = arith.constant 0 : index
    %0 = vector.load %arg1[%c0, %c0_0, %c0_1] : memref<8x32x160xbf16, #tpu.memory_space<vmem>>, vector<8x32x160xbf16>
    %1 = vector.shape_cast %0 : vector<8x32x160xbf16> to vector<256x160xbf16>
    %c0_2 = arith.constant 0 : index
    %c0_3 = arith.constant 0 : index
    %2 = vector.load %arg2[%c0_2, %c0_3] : memref<160x128xbf16, #tpu.memory_space<vmem>>, vector<160x128xbf16>
    %cst = arith.constant dense<0.000000e+00> : vector<256x128xf32>
    %3 = tpu.matmul %1, %2, %cst {dimension_numbers = #tpu.dot_dimension_numbers<[1], [0], [0], [1], [0, 0, 1, 1], [], []>} : vector<256x160xbf16>, vector<160x128xbf16>, vector<256x128xf32> -> vector<256x128xf32>
    %c0_4 = arith.constant 0 : index
    %c0_5 = arith.constant 0 : index
    %4 = vector.load %arg3[%c0_4, %c0_5] : memref<1x128xf32, #tpu.memory_space<vmem>>, vector<1x128xf32>
    %5 = vector.broadcast %4 : vector<1x128xf32> to vector<256x128xf32>
    %6 = arith.addf %3, %5 : vector<256x128xf32>
    %cst_6 = arith.constant 0.000000e+00 : f32
    %7 = vector.broadcast %cst_6 : f32 to vector<256x128xf32>
    %8 = arith.maximumf %6, %7 : vector<256x128xf32>
    %9 = vector.shape_cast %8 : vector<256x128xf32> to vector<8x32x128xf32>
    %c0_7 = arith.constant 0 : index
    %c0_8 = arith.constant 0 : index
    %10 = vector.load %arg4[%c0_7, %c0_8] : memref<32x128xf32, #tpu.memory_space<vmem>>, vector<32x128xf32>
    %11 = vector.shape_cast %10 : vector<32x128xf32> to vector<1x32x128xf32>
    %12 = vector.broadcast %11 : vector<1x32x128xf32> to vector<8x32x128xf32>
    %13 = arith.mulf %9, %12 : vector<8x32x128xf32>
    %cst_9 = arith.constant dense<0xFF800000> : vector<8x128xf32>
    %14 = vector.multi_reduction <maximumf>, %13, %cst_9 [1] : vector<8x32x128xf32> to vector<8x128xf32>
    %15 = arith.truncf %14 : vector<8x128xf32> to vector<8x128xbf16>
    %c0_10 = arith.constant 0 : index
    %c0_11 = arith.constant 0 : index
    %16 = vector.load %arg5[%c0_10, %c0_11] : memref<128x128xbf16, #tpu.memory_space<vmem>>, vector<128x128xbf16>
    %cst_12 = arith.constant dense<0.000000e+00> : vector<8x128xf32>
    %17 = tpu.matmul %15, %16, %cst_12 {dimension_numbers = #tpu.dot_dimension_numbers<[1], [0], [0], [1], [0, 0, 1, 1], [], []>} : vector<8x128xbf16>, vector<128x128xbf16>, vector<8x128xf32> -> vector<8x128xf32>
    %c0_13 = arith.constant 0 : index
    %c0_14 = arith.constant 0 : index
    %18 = vector.load %arg6[%c0_13, %c0_14] : memref<1x128xf32, #tpu.memory_space<vmem>>, vector<1x128xf32>
    %19 = vector.broadcast %18 : vector<1x128xf32> to vector<8x128xf32>
    %20 = arith.addf %17, %19 : vector<8x128xf32>
    %c0_15 = arith.constant 0 : index
    %c0_16 = arith.constant 0 : index
    %21 = vector.load %arg7[%c0_15, %c0_16] : memref<8x128xf32, #tpu.memory_space<vmem>>, vector<8x128xf32>
    tpu.vector_store %arg7[%c0_15, %c0_16], %20 {strides = array<i32>} : memref<8x128xf32, #tpu.memory_space<vmem>>, vector<8x128xf32>,
    return
  }
  func.func @transform_0(%arg0: i32) -> (i32, i32, i32) {
    %c0_i32 = arith.constant 0 : i32
    %c0_i32_0 = arith.constant 0 : i32
    %c0_i32_1 = arith.constant 0 : i32
    return %arg0, %c0_i32, %c0_i32_0 : i32, i32, i32
  }
  func.func @transform_1(%arg0: i32) -> (i32, i32) {
    %c0_i32 = arith.constant 0 : i32
    %c0_i32_0 = arith.constant 0 : i32
    %c0_i32_1 = arith.constant 0 : i32
    return %c0_i32, %c0_i32_0 : i32, i32
  }
  func.func @transform_2(%arg0: i32) -> (i32, i32) {
    %c0_i32 = arith.constant 0 : i32
    %c0_i32_0 = arith.constant 0 : i32
    %c0_i32_1 = arith.constant 0 : i32
    return %c0_i32, %c0_i32_0 : i32, i32
  }
  func.func @transform_3(%arg0: i32) -> (i32, i32) {
    %c0_i32 = arith.constant 0 : i32
    %c0_i32_0 = arith.constant 0 : i32
    %c0_i32_1 = arith.constant 0 : i32
    return %c0_i32, %c0_i32_0 : i32, i32
  }
  func.func @transform_4(%arg0: i32) -> (i32, i32) {
    %c0_i32 = arith.constant 0 : i32
    %c0_i32_0 = arith.constant 0 : i32
    %c0_i32_1 = arith.constant 0 : i32
    return %c0_i32, %c0_i32_0 : i32, i32
  }
  func.func @transform_5(%arg0: i32) -> (i32, i32) {
    %c0_i32 = arith.constant 0 : i32
    %c0_i32_0 = arith.constant 0 : i32
    %c0_i32_1 = arith.constant 0 : i32
    return %c0_i32, %c0_i32_0 : i32, i32
  }
  func.func @transform_6(%arg0: i32) -> (i32, i32) {
    %c0_i32 = arith.constant 0 : i32
    %c0_i32_0 = arith.constant 0 : i32
    return %arg0, %c0_i32 : i32, i32
  }
}

</mosaic_0001>

<llo_original>
// kernel: _apply.1
$region0: #{_apply.1}
  #allocation0 [shape = 'u32[]', space=smem, size = 0x4, offset = 0x4, fixed_abs, tag = 'smem constant byte address 0x4 - core index']
  #allocation1 [shape = 'u32[144,128]{1,0:T(1,128)}', space=vmem, size = 0x12000, scoped, tag = 'internal scratch']
  %s0 = inlined_call_operand.vmem [shape: bf16[16,32,160], index: 0, kind: input, shape index: {}]
  %s1 = inlined_call_operand.vmem [shape: bf16[160,128], index: 1, kind: input, shape index: {}]
  %s2 = inlined_call_operand.vmem [shape: f32[1,128], index: 2, kind: input, shape index: {}]
  %s3 = inlined_call_operand.vmem [shape: f32[32,128], index: 3, kind: input, shape index: {}]
  %s4 = inlined_call_operand.vmem [shape: bf16[128,128], index: 4, kind: input, shape index: {}]
  %s5 = inlined_call_operand.vmem [shape: f32[1,128], index: 5, kind: input, shape index: {}]
  %s6 = inlined_call_operand.vmem [shape: f32[16,128], index: 6, kind: output, shape index: {}]
  %s7 = sld [smem:[#allocation0]]
  $region57: #{_apply.1} parent=0
    _
  %s9 = ssub.s32 1, %s7
  %s10 = scalar_select 0, %s9, %s7
  loop: start=0, step=1, limit=4
  $region2: #{_apply.1} parent=0 // loop_pre_header
    _
  $region3: #{_apply.1} parent=0 // loop_header
    %s12 = sphi 0, %s16
    %p13 = scmp.ge.s32.totalorder %s12, 4
    %s22 = sphi 0, %s24
    %s25 = sphi 0, %s22
    %s26 = sphi 0, %s25
    %s42 = sphi 0, %s26
    %s46 = sphi 0, %s46
    %s48 = sphi 0, %s46
    %s49 = sphi 0, %s48
    %s63 = sphi 0, %s49
    %s67 = sphi 0, %s67
    %s69 = sphi 0, %s67
    %s70 = sphi 0, %s69
    %s84 = sphi 0, %s70
    %s88 = sphi 0, %s88
    %s90 = sphi 0, %s88
    %s91 = sphi 0, %s90
    %s105 = sphi 0, %s91
    %s109 = sphi 0, %s109
    %s111 = sphi 0, %s109
    %s112 = sphi 0, %s111
    %s126 = sphi 0, %s112
    %s130 = sphi 0, %s130
    %s132 = sphi 0, %s130
    %s133 = sphi 0, %s132
    %s147 = sphi 0, %s133
    %s153 = sphi 0, %s155
    %s156 = sphi 0, %s153
    %s157 = sphi 0, %s156
    %s173 = sphi 0, %s157
  $region4: #{_apply.1} parent=0 // loop_header_branch
    %15 = sbr.rel (%p13) target = $region8
  $region5: #{_apply.1} parent=0 // loop_body
    %s17 = ssub.s32 %s12, 1
    %s18 = ssub.s32 %s12, 2
    %s19 = sadd.s32 %s12, 1
    %s20 = ssub.s32 %s12, %s19
    %p21 = scmp.eq.s32.totalorder %s20, 0
    %s23 = sadd.s32 %s22, 1
    %s24 = scalar_select %p21, %s22, %s23
    %p27 = pneg %p21
    %p28 = scmp.eq.s32.totalorder %s12, 1
    %p29 = por %p27, %p28
    %p30 = scmp.ne.s32.totalorder %s22, %s25
    %p31 = scmp.eq.s32.totalorder %s12, 0
    %p32 = por %p30, %p31
    %p33 = scmp.ne.s32.totalorder %s22, %s25
    %p34 = scmp.eq.s32.totalorder %s17, 1
    %p35 = por %p33, %p34
    %p36 = scmp.ne.s32.totalorder %s25, %s26
    %p37 = scmp.eq.s32.totalorder %s17, 0
    %p38 = por %p36, %p37
    %p39 = scmp.ne.s32.totalorder %s25, %s26
    %p40 = scmp.eq.s32.totalorder %s18, 1
    %p41 = por %p39, %p40
    %p43 = scmp.ne.s32.totalorder %s26, %s42
    %p44 = scmp.eq.s32.totalorder %s18, 0
    %p45 = por %p43, %p44
    %s47 = sadd.s32 %s46, 1
    %p50 = scmp.eq.s32.totalorder %s12, 1
    %p51 = scmp.ne.s32.totalorder %s46, %s48
    %p52 = scmp.eq.s32.totalorder %s12, 0
    %p53 = por %p51, %p52
    %p54 = scmp.ne.s32.totalorder %s46, %s48
    %p55 = scmp.eq.s32.totalorder %s17, 1
    %p56 = por %p54, %p55
    %p57 = scmp.ne.s32.totalorder %s48, %s49
    %p58 = scmp.eq.s32.totalorder %s17, 0
    %p59 = por %p57, %p58
    %p60 = scmp.ne.s32.totalorder %s48, %s49
    %p61 = scmp.eq.s32.totalorder %s18, 1
    %p62 = por %p60, %p61
    %p64 = scmp.ne.s32.totalorder %s49, %s63
    %p65 = scmp.eq.s32.totalorder %s18, 0
    %p66 = por %p64, %p65
    %s68 = sadd.s32 %s67, 1
    %p71 = scmp.eq.s32.totalorder %s12, 1
    %p72 = scmp.ne.s32.totalorder %s67, %s69
    %p73 = scmp.eq.s32.totalorder %s12, 0
    %p74 = por %p72, %p73
    %p75 = scmp.ne.s32.totalorder %s67, %s69
    %p76 = scmp.eq.s32.totalorder %s17, 1
    %p77 = por %p75, %p76
    %p78 = scmp.ne.s32.totalorder %s69, %s70
    %p79 = scmp.eq.s32.totalorder %s17, 0
    %p80 = por %p78, %p79
    %p81 = scmp.ne.s32.totalorder %s69, %s70
    %p82 = scmp.eq.s32.totalorder %s18, 1
    %p83 = por %p81, %p82
    %p85 = scmp.ne.s32.totalorder %s70, %s84
    %p86 = scmp.eq.s32.totalorder %s18, 0
    %p87 = por %p85, %p86
    %s89 = sadd.s32 %s88, 1
    %p92 = scmp.eq.s32.totalorder %s12, 1
    %p93 = scmp.ne.s32.totalorder %s88, %s90
    %p94 = scmp.eq.s32.totalorder %s12, 0
    %p95 = por %p93, %p94
    %p96 = scmp.ne.s32.totalorder %s88, %s90
    %p97 = scmp.eq.s32.totalorder %s17, 1
    %p98 = por %p96, %p97
    %p99 = scmp.ne.s32.totalorder %s90, %s91
    %p100 = scmp.eq.s32.totalorder %s17, 0
    %p101 = por %p99, %p100
    %p102 = scmp.ne.s32.totalorder %s90, %s91
    %p103 = scmp.eq.s32.totalorder %s18, 1
    %p104 = por %p102, %p103
    %p106 = scmp.ne.s32.totalorder %s91, %s105
    %p107 = scmp.eq.s32.totalorder %s18, 0
    %p108 = por %p106, %p107
    %s110 = sadd.s32 %s109, 1
    %p113 = scmp.eq.s32.totalorder %s12, 1
    %p114 = scmp.ne.s32.totalorder %s109, %s111
    %p115 = scmp.eq.s32.totalorder %s12, 0
    %p116 = por %p114, %p115
    %p117 = scmp.ne.s32.totalorder %s109, %s111
    %p118 = scmp.eq.s32.totalorder %s17, 1
    %p119 = por %p117, %p118
    %p120 = scmp.ne.s32.totalorder %s111, %s112
    %p121 = scmp.eq.s32.totalorder %s17, 0
    %p122 = por %p120, %p121
    %p123 = scmp.ne.s32.totalorder %s111, %s112
    %p124 = scmp.eq.s32.totalorder %s18, 1
    %p125 = por %p123, %p124
    %p127 = scmp.ne.s32.totalorder %s112, %s126
    %p128 = scmp.eq.s32.totalorder %s18, 0
    %p129 = por %p127, %p128
    %s131 = sadd.s32 %s130, 1
    %p134 = scmp.eq.s32.totalorder %s12, 1
    %p135 = scmp.ne.s32.totalorder %s130, %s132
    %p136 = scmp.eq.s32.totalorder %s12, 0
    %p137 = por %p135, %p136
    %p138 = scmp.ne.s32.totalorder %s130, %s132
    %p139 = scmp.eq.s32.totalorder %s17, 1
    %p140 = por %p138, %p139
    %p141 = scmp.ne.s32.totalorder %s132, %s133
    %p142 = scmp.eq.s32.totalorder %s17, 0
    %p143 = por %p141, %p142
    %p144 = scmp.ne.s32.totalorder %s132, %s133
    %p145 = scmp.eq.s32.totalorder %s18, 1
    %p146 = por %p144, %p145
    %p148 = scmp.ne.s32.totalorder %s133, %s147
    %p149 = scmp.eq.s32.totalorder %s18, 0
    %p150 = por %p148, %p149
    %s151 = ssub.s32 %s12, %s19
    %p152 = scmp.eq.s32.totalorder %s151, 0
    %s154 = sadd.s32 %s153, 1
    %s155 = scalar_select %p152, %s153, %s154
    %p158 = pneg %p152
    %p159 = scmp.eq.s32.totalorder %s12, 1
    %p160 = por %p158, %p159
    %p161 = scmp.ne.s32.totalorder %s153, %s156
    %p162 = scmp.eq.s32.totalorder %s12, 0
    %p163 = por %p161, %p162
    %p164 = scmp.ne.s32.totalorder %s153, %s156
    %p165 = scmp.eq.s32.totalorder %s17, 1
    %p166 = por %p164, %p165
    %p167 = scmp.ne.s32.totalorder %s156, %s157
    %p168 = scmp.eq.s32.totalorder %s17, 0
    %p169 = por %p167, %p168
    %p170 = scmp.ne.s32.totalorder %s156, %s157
    %p171 = scmp.eq.s32.totalorder %s18, 1
    %p172 = por %p170, %p171
    %p174 = scmp.ne.s32.totalorder %s157, %s173
    %p175 = scmp.eq.s32.totalorder %s18, 0
    %p176 = por %p174, %p175
    %p177 = scmp.le.s32.totalorder 1, %s12
    %p178 = scmp.lt.s32.totalorder %s12, 3
    %p179 = pnand %p177, %p178
    %p180 = pneg %p179
    // Predicated region
    $region9: #{_apply.1} parent=5 // pred_check
      _
    $region10: #{_apply.1} parent=5 // pred_check_branch
      %182 = sbr.rel (%p179) target = $region12
    $region11: #{_apply.1} parent=5 // pred_region
      %s183 = ssub.s32 %s12, 1
      // Predicated region
      $region13: #{_apply.1} parent=11 // pred_check
        %p184 = pneg %p59
      $region14: #{_apply.1} parent=11 // pred_check_branch
        %186 = sbr.rel (%p184) target = $region16
      $region15: #{_apply.1} parent=11 // pred_region
        _
      $region16: #{_apply.1} parent=11 // pred_fallthru
        _
      // Predicated region
      $region17: #{_apply.1} parent=11 // pred_check
        %p187 = pneg %p80
      $region18: #{_apply.1} parent=11 // pred_check_branch
        %189 = sbr.rel (%p187) target = $region20
      $region19: #{_apply.1} parent=11 // pred_region
        _
      $region20: #{_apply.1} parent=11 // pred_fallthru
        _
      // Predicated region
      $region21: #{_apply.1} parent=11 // pred_check
        %p190 = pneg %p101
      $region22: #{_apply.1} parent=11 // pred_check_branch
        %192 = sbr.rel (%p190) target = $region24
      $region23: #{_apply.1} parent=11 // pred_region
        _
      $region24: #{_apply.1} parent=11 // pred_fallthru
        _
      // Predicated region
      $region25: #{_apply.1} parent=11 // pred_check
        %p193 = pneg %p122
      $region26: #{_apply.1} parent=11 // pred_check_branch
        %195 = sbr.rel (%p193) target = $region28
      $region27: #{_apply.1} parent=11 // pred_region
        _
      $region28: #{_apply.1} parent=11 // pred_fallthru
        _
      // Predicated region
      $region29: #{_apply.1} parent=11 // pred_check
        %p196 = pneg %p143
      $region30: #{_apply.1} parent=11 // pred_check_branch
        %198 = sbr.rel (%p196) target = $region32
      $region31: #{_apply.1} parent=11 // pred_region
        _
      $region32: #{_apply.1} parent=11 // pred_fallthru
        _
    $region12: #{_apply.1} parent=5 // pred_fallthru
      _
    %p199 = scmp.lt.s32.totalorder %s12, 2
    // Predicated region
    $region33: #{_apply.1} parent=5 // pred_check
      %p200 = pneg %p199
    $region34: #{_apply.1} parent=5 // pred_check_branch
      %202 = sbr.rel (%p200) target = $region36
    $region35: #{_apply.1} parent=5 // pred_region
      // Predicated region
      $region37: #{_apply.1} parent=35 // pred_check
        %p203 = pneg %p32
      $region38: #{_apply.1} parent=35 // pred_check_branch
        %205 = sbr.rel (%p203) target = $region40
      $region39: #{_apply.1} parent=35 // pred_region
        %s206 = smul.u32 8, %s12
        %p207 = scmp.lt.s32.totalorder %s206, 15
        %s208 = scalar_select %p207, %s206, 15
        %s209 = smul.addr %s208, 8
        %s210 = smul.addr %s209, 4
        %s211 = scalar_lea.vmem %s0, %s210
        %s212 = smul.u32 8, %s12
      $region40: #{_apply.1} parent=35 // pred_fallthru
        _
    $region36: #{_apply.1} parent=5 // pred_fallthru
      _
    %p213 = scmp.le.s32.totalorder 1, %s12
    %p214 = scmp.lt.s32.totalorder %s12, 3
    %p215 = pnand %p213, %p214
    %p216 = pneg %p215
    // Predicated region
    $region41: #{_apply.1} parent=5 // pred_check
      _
    $region42: #{_apply.1} parent=5 // pred_check_branch
      %218 = sbr.rel (%p215) target = $region44
    $region43: #{_apply.1} parent=5 // pred_region
      %s219 = ssub.s32 %s12, 1
      %s220 = smul.u32 8, %s17
      %p221 = scmp.lt.s32.totalorder %s220, 15
      %s222 = scalar_select %p221, %s220, 15
      %s223 = smul.addr %s222, 8
      %s224 = smul.addr %s223, 4
      %s225 = scalar_lea.vmem %s0, %s224
      %p226 = pneg %p38
      %p227 = pneg %p35
      %p228 = pneg %p59
      %p229 = pneg %p56
      %p230 = pneg %p80
      %p231 = pneg %p77
      %p232 = pneg %p101
      %p233 = pneg %p98
      %p234 = pneg %p122
      %p235 = pneg %p119
      %p236 = pneg %p143
      %p237 = pneg %p140
      %p238 = pneg %p169
      %p239 = pneg %p166
      %p240 = scmp.lt.s32.totalorder %s17, 1
      %s241 = scalar_select %p240, %s17, 1
      %s242 = smul.addr %s241, 8
      %s243 = scalar_lea.vmem %s6, %s242
      %s244 = smul.u32 8, %s17
      %p245 = scmp.lt.s32.totalorder %s244, 15
      %s246 = scalar_select %p245, %s244, 15
      %s247 = smul.addr %s246, 8
      %s248 = smul.addr %s247, 4
      %s249 = scalar_lea.vmem %s0, %s248
      %s250 = smul.u32 8, %s17
      %p251 = scmp.lt.s32.totalorder %s17, 1
      %s252 = scalar_select %p251, %s17, 1
      %s253 = smul.addr %s252, 8
      %s254 = scalar_lea.vmem %s6, %s253
      %v256 = vld [vmem:[%s249] sm:$0xff]
      %v257 = vld [vmem:[%s249 + $0x8] sm:$0xff]
      %v258 = vld [vmem:[%s249 + $0x10] sm:$0xff]
      %v259 = vld [vmem:[%s249 + $0x18] sm:$0xff]
      %v260 = vld [vmem:[%s249 + $0x20] sm:$0xff]
      %v261 = vld [vmem:[%s249 + $0x28] sm:$0xff]
      %v262 = vld [vmem:[%s249 + $0x30] sm:$0xff]
      %v263 = vld [vmem:[%s249 + $0x38] sm:$0xff]
      %v264 = vld [vmem:[%s249 + $0x40] sm:$0xff]
      %v265 = vld [vmem:[%s249 + $0x48] sm:$0xff]
      %v266 = vld [vmem:[%s249 + $0x50] sm:$0xff]
      %v267 = vld [vmem:[%s249 + $0x58] sm:$0xff]
      %v268 = vld [vmem:[%s249 + $0x60] sm:$0xff]
      %v269 = vld [vmem:[%s249 + $0x68] sm:$0xff]
      %v270 = vld [vmem:[%s249 + $0x70] sm:$0xff]
      %v271 = vld [vmem:[%s249 + $0x78] sm:$0xff]
      %v272 = vld [vmem:[%s249 + $0x80] sm:$0xff]
      %v273 = vld [vmem:[%s249 + $0x88] sm:$0xff]
      %v274 = vld [vmem:[%s249 + $0x90] sm:$0xff]
      %v275 = vld [vmem:[%s249 + $0x98] sm:$0xff]
      %v276 = vld [vmem:[%s249 + $0xa0] sm:$0xff]
      %v277 = vld [vmem:[%s249 + $0xa8] sm:$0xff]
      %v278 = vld [vmem:[%s249 + $0xb0] sm:$0xff]
      %v279 = vld [vmem:[%s249 + $0xb8] sm:$0xff]
      %v280 = vld [vmem:[%s249 + $0xc0] sm:$0xff]
      %v281 = vld [vmem:[%s249 + $0xc8] sm:$0xff]
      %v282 = vld [vmem:[%s249 + $0xd0] sm:$0xff]
      %v283 = vld [vmem:[%s249 + $0xd8] sm:$0xff]
      %v284 = vld [vmem:[%s249 + $0xe0] sm:$0xff]
      %v285 = vld [vmem:[%s249 + $0xe8] sm:$0xff]
      %v286 = vld [vmem:[%s249 + $0xf0] sm:$0xff]
      %v287 = vld [vmem:[%s249 + $0xf8] sm:$0xff]
      %v288 = vld [vmem:[%s1] sm:$0xf]
      %v289 = vld [vmem:[%s1 + $0x4] sm:$0xf]
      %v290 = vld [vmem:[%s1 + $0x8] sm:$0xf]
      %v291 = vld [vmem:[%s1 + $0xc] sm:$0xf]
      %v292 = vld [vmem:[%s1 + $0x10] sm:$0xf]
      %v293 = vld [vmem:[%s1 + $0x14] sm:$0xf]
      %v294 = vld [vmem:[%s1 + $0x18] sm:$0xf]
      %v295 = vld [vmem:[%s1 + $0x1c] sm:$0xf]
      %v296 = vld [vmem:[%s1 + $0x20] sm:$0xf]
      %v297 = vld [vmem:[%s1 + $0x24] sm:$0xf]
      %v298 = vld [vmem:[%s1 + $0x28] sm:$0xf]
      %v299 = vld [vmem:[%s1 + $0x2c] sm:$0xf]
      %v300 = vld [vmem:[%s1 + $0x30] sm:$0xf]
      %v301 = vld [vmem:[%s1 + $0x34] sm:$0xf]
      %v302 = vld [vmem:[%s1 + $0x38] sm:$0xf]
      %v303 = vld [vmem:[%s1 + $0x3c] sm:$0xf]
      %v304 = vld [vmem:[%s1 + $0x40] sm:$0xf]
      %v305 = vld [vmem:[%s1 + $0x44] sm:$0xf]
      %v306 = vld [vmem:[%s1 + $0x48] sm:$0xf]
      %v307 = vld [vmem:[%s1 + $0x4c] sm:$0xf]
      %v308 = vld [vmem:[%s2] sm:$0x1]
      %v310 = vlaneseq
      %v311 = vshrl.u32 %v310, 7
      %v312 = vsub.s32 0, %v311
      %v313 = vrot.slane %v308, %v312
      %v347 = vunpack.c.l.b16 %v256
      %v348 = vunpack.c.h.b16 %v256
      %v349 = vunpack.c.l.b16 %v257
      %v350 = vunpack.c.h.b16 %v257
      %v351 = vunpack.c.l.b16 %v258
      %v352 = vunpack.c.h.b16 %v258
      %v353 = vunpack.c.l.b16 %v259
      %v354 = vunpack.c.h.b16 %v259
      %v355 = vunpack.c.l.b16 %v260
      %v356 = vunpack.c.h.b16 %v260
      %v357 = vunpack.c.l.b16 %v261
      %v358 = vunpack.c.h.b16 %v261
      %v359 = vunpack.c.l.b16 %v262
      %v360 = vunpack.c.h.b16 %v262
      %v361 = vunpack.c.l.b16 %v263
      %v362 = vunpack.c.h.b16 %v263
      %v363 = vunpack.c.l.b16 %v264
      %v364 = vunpack.c.h.b16 %v264
      %v365 = vunpack.c.l.b16 %v265
      %v366 = vunpack.c.h.b16 %v265
      %v367 = vunpack.c.l.b16 %v266
      %v368 = vunpack.c.h.b16 %v266
      %v369 = vunpack.c.l.b16 %v267
      %v370 = vunpack.c.h.b16 %v267
      %v371 = vunpack.c.l.b16 %v268
      %v372 = vunpack.c.h.b16 %v268
      %v373 = vunpack.c.l.b16 %v269
      %v374 = vunpack.c.h.b16 %v269
      %v375 = vunpack.c.l.b16 %v270
      %v376 = vunpack.c.h.b16 %v270
      %v377 = vunpack.c.l.b16 %v271
      %v378 = vunpack.c.h.b16 %v271
      %v379 = vunpack.c.l.b16 %v272
      %v380 = vunpack.c.h.b16 %v272
      %v381 = vunpack.c.l.b16 %v273
      %v382 = vunpack.c.h.b16 %v273
      %v383 = vunpack.c.l.b16 %v274
      %v384 = vunpack.c.h.b16 %v274
      %v385 = vunpack.c.l.b16 %v275
      %v386 = vunpack.c.h.b16 %v275
      %v387 = vunpack.c.l.b16 %v276
      %v388 = vunpack.c.h.b16 %v276
      %v389 = vunpack.c.l.b16 %v277
      %v390 = vunpack.c.h.b16 %v277
      %v391 = vunpack.c.l.b16 %v278
      %v392 = vunpack.c.h.b16 %v278
      %v393 = vunpack.c.l.b16 %v279
      %v394 = vunpack.c.h.b16 %v279
      %v395 = vunpack.c.l.b16 %v280
      %v396 = vunpack.c.h.b16 %v280
      %v397 = vunpack.c.l.b16 %v281
      %v398 = vunpack.c.h.b16 %v281
      %v399 = vunpack.c.l.b16 %v282
      %v400 = vunpack.c.h.b16 %v282
      %v401 = vunpack.c.l.b16 %v283
      %v402 = vunpack.c.h.b16 %v283
      %v403 = vunpack.c.l.b16 %v284
      %v404 = vunpack.c.h.b16 %v284
      %v405 = vunpack.c.l.b16 %v285
      %v406 = vunpack.c.h.b16 %v285
      %v407 = vunpack.c.l.b16 %v286
      %v408 = vunpack.c.h.b16 %v286
      %v409 = vunpack.c.l.b16 %v287
      %v410 = vunpack.c.h.b16 %v287
      %v411 = vpack.c.b16 %v349, %v347
      %v412 = vpack.c.b16 %v350, %v348
      %v413 = vpack.c.b16 %v353, %v351
      %v414 = vpack.c.b16 %v354, %v352
      %v415 = vpack.c.b16 %v357, %v355
      %v416 = vpack.c.b16 %v358, %v356
      %v417 = vpack.c.b16 %v361, %v359
      %v418 = vpack.c.b16 %v362, %v360
      %v419 = vpack.c.b16 %v365, %v363
      %v420 = vpack.c.b16 %v366, %v364
      %v421 = vpack.c.b16 %v369, %v367
      %v422 = vpack.c.b16 %v370, %v368
      %v423 = vpack.c.b16 %v373, %v371
      %v424 = vpack.c.b16 %v374, %v372
      %v425 = vpack.c.b16 %v377, %v375
      %v426 = vpack.c.b16 %v378, %v376
      %v427 = vpack.c.b16 %v381, %v379
      %v428 = vpack.c.b16 %v382, %v380
      %v429 = vpack.c.b16 %v385, %v383
      %v430 = vpack.c.b16 %v386, %v384
      %v431 = vpack.c.b16 %v389, %v387
      %v432 = vpack.c.b16 %v390, %v388
      %v433 = vpack.c.b16 %v393, %v391
      %v434 = vpack.c.b16 %v394, %v392
      %v435 = vpack.c.b16 %v397, %v395
      %v436 = vpack.c.b16 %v398, %v396
      %v437 = vpack.c.b16 %v401, %v399
      %v438 = vpack.c.b16 %v402, %v400
      %v439 = vpack.c.b16 %v405, %v403
      %v440 = vpack.c.b16 %v406, %v404
      %v441 = vpack.c.b16 %v409, %v407
      %v442 = vpack.c.b16 %v410, %v408
      %v479 = vunpack.c.l.b16 %v288
      %v480 = vunpack.c.l.b16 %v289
      %v481 = vunpack.c.l.b16 %v290
      %v482 = vunpack.c.l.b16 %v291
      %v483 = vunpack.c.l.b16 %v292
      %v484 = vunpack.c.l.b16 %v293
      %v485 = vunpack.c.l.b16 %v294
      %v486 = vunpack.c.l.b16 %v295
      %v487 = vunpack.c.l.b16 %v296
      %v488 = vunpack.c.l.b16 %v297
      %v489 = vunpack.c.l.b16 %v298
      %v490 = vunpack.c.l.b16 %v299
      %v491 = vunpack.c.l.b16 %v300
      %v492 = vunpack.c.l.b16 %v301
      %v493 = vunpack.c.l.b16 %v302
      %v494 = vunpack.c.l.b16 %v303
      %v495 = vunpack.c.l.b16 %v304
      %v496 = vunpack.c.l.b16 %v305
      %v497 = vunpack.c.l.b16 %v306
      %v498 = vunpack.c.l.b16 %v307
      %v499 = vpack.c.b16 %v480, %v479
      %v500 = vpack.c.b16 %v482, %v481
      %v501 = vpack.c.b16 %v484, %v483
      %v502 = vpack.c.b16 %v486, %v485
      %v503 = vpack.c.b16 %v488, %v487
      %v504 = vpack.c.b16 %v490, %v489
      %v505 = vpack.c.b16 %v492, %v491
      %v506 = vpack.c.b16 %v494, %v493
      %v507 = vpack.c.b16 %v496, %v495
      %v508 = vpack.c.b16 %v498, %v497
      %vm519 = vcmask 261120
      %v521 = vsel %vm519, %v412, 0
      %v524 = vsel %vm519, %v414, 0
      %v527 = vsel %vm519, %v416, 0
      %v530 = vsel %vm519, %v418, 0
      %v533 = vsel %vm519, %v420, 0
      %v536 = vsel %vm519, %v422, 0
      %v539 = vsel %vm519, %v424, 0
      %v542 = vsel %vm519, %v426, 0
      %v545 = vsel %vm519, %v428, 0
      %v548 = vsel %vm519, %v430, 0
      %v551 = vsel %vm519, %v432, 0
      %v554 = vsel %vm519, %v434, 0
      %v557 = vsel %vm519, %v436, 0
      %v560 = vsel %vm519, %v438, 0
      %v563 = vsel %vm519, %v440, 0
      %v566 = vsel %vm519, %v442, 0
      %568 = vmatprep.subr.bf16.mxu0 0
      %569 = vmatpush1.bf16.msra.mxu0 %v499
      %570 = vmatprep.subr.bf16.mxu0 0
      %571 = vmatpush1.bf16.msra.mxu0 %v500
      %572 = vmatprep.subr.bf16.mxu0 0
      %573 = vmatpush1.bf16.msra.mxu0 %v501
      %574 = vmatprep.subr.bf16.mxu0 0
      %575 = vmatpush1.bf16.msra.mxu0 %v502
      %576 = vmatprep.subr.bf16.mxu0 0
      %577 = vmatpush1.bf16.msra.mxu0 %v503
      %578 = vmatprep.subr.bf16.mxu0 0
      %579 = vmatpush1.bf16.msra.mxu0 %v504
      %580 = vmatprep.subr.bf16.mxu0 0
      %581 = vmatpush1.bf16.msra.mxu0 %v505
      %582 = vmatprep.subr.bf16.mxu0 0
      %583 = vmatpush1.bf16.msra.mxu0 %v506
      %584 = vmatprep.subr.bf16.mxu0 0
      %585 = vmatpush1.bf16.msra.mxu0 %v507
      %586 = vmatprep.subr.bf16.mxu0 0
      %587 = vmatpush1.bf16.msra.mxu0 %v508
      %588 = vmatprep.subr.bf16.mxu0 0
      %589 = vmatpush1.bf16.msra.mxu0 0
      %590 = vmatprep.subr.bf16.mxu0 0
      %591 = vmatpush1.bf16.msra.mxu0 0
      %592 = vmatprep.subr.bf16.mxu0 0
      %593 = vmatpush1.bf16.msra.mxu0 0
      %594 = vmatprep.subr.bf16.mxu0 0
      %595 = vmatpush1.bf16.msra.mxu0 0
      %596 = vmatprep.subr.bf16.mxu0 0
      %597 = vmatpush1.bf16.msra.mxu0 0
      %598 = vmatprep.subr.bf16.mxu0 0
      %599 = vmatpush1.bf16.msra.mxu0 0
      %600 = vmatprep.mubr.bf16.mxu0 %v521
      %601 = vmatmul.mubr.bf16.gmra.mrb[0].mxu0 %v411
      %v602 = vpop.f32.mrb[0].mxu0
      %v603 = vadd.f32 %v313, %v602
      %v604 = vpop.f32.mrb[0].mxu0
      %v605 = vpop.f32.mrb[0].mxu0
      %v606 = vadd.f32 %v313, %v605
      %v607 = vpop.f32.mrb[0].mxu0
      %608 = vmatprep.mubr.bf16.mxu0 %v524
      %609 = vmatmul.mubr.bf16.gmra.mrb[0].mxu0 %v413
      %v610 = vpop.f32.mrb[0].mxu0
      %v611 = vadd.f32 %v313, %v610
      %v612 = vpop.f32.mrb[0].mxu0
      %v613 = vpop.f32.mrb[0].mxu0
      %v614 = vadd.f32 %v313, %v613
      %v615 = vpop.f32.mrb[0].mxu0
      %616 = vmatprep.mubr.bf16.mxu0 %v527
      %617 = vmatmul.mubr.bf16.gmra.mrb[0].mxu0 %v415
      %v618 = vpop.f32.mrb[0].mxu0
      %v619 = vadd.f32 %v313, %v618
      %v620 = vpop.f32.mrb[0].mxu0
      %v621 = vpop.f32.mrb[0].mxu0
      %v622 = vadd.f32 %v313, %v621
      %v623 = vpop.f32.mrb[0].mxu0
      %624 = vmatprep.mubr.bf16.mxu0 %v530
      %625 = vmatmul.mubr.bf16.gmra.mrb[0].mxu0 %v417
      %v626 = vpop.f32.mrb[0].mxu0
      %v627 = vadd.f32 %v313, %v626
      %v628 = vpop.f32.mrb[0].mxu0
      %v629 = vpop.f32.mrb[0].mxu0
      %v630 = vadd.f32 %v313, %v629
      %v631 = vpop.f32.mrb[0].mxu0
      %632 = vmatprep.mubr.bf16.mxu0 %v533
      %633 = vmatmul.mubr.bf16.gmra.mrb[0].mxu0 %v419
      %v634 = vpop.f32.mrb[0].mxu0
      %v635 = vadd.f32 %v313, %v634
      %v636 = vpop.f32.mrb[0].mxu0
      %v637 = vpop.f32.mrb[0].mxu0
      %v638 = vadd.f32 %v313, %v637
      %v639 = vpop.f32.mrb[0].mxu0
      %640 = vmatprep.mubr.bf16.mxu0 %v536
      %641 = vmatmul.mubr.bf16.gmra.mrb[0].mxu0 %v421
      %v642 = vpop.f32.mrb[0].mxu0
      %v643 = vadd.f32 %v313, %v642
      %v644 = vpop.f32.mrb[0].mxu0
      %v645 = vpop.f32.mrb[0].mxu0
      %v646 = vadd.f32 %v313, %v645
      %v647 = vpop.f32.mrb[0].mxu0
      %648 = vmatprep.mubr.bf16.mxu0 %v539
      %649 = vmatmul.mubr.bf16.gmra.mrb[0].mxu0 %v423
      %v650 = vpop.f32.mrb[0].mxu0
      %v651 = vadd.f32 %v313, %v650
      %v652 = vpop.f32.mrb[0].mxu0
      %v653 = vpop.f32.mrb[0].mxu0
      %v654 = vadd.f32 %v313, %v653
      %v655 = vpop.f32.mrb[0].mxu0
      %656 = vmatprep.mubr.bf16.mxu0 %v542
      %657 = vmatmul.mubr.bf16.gmra.mrb[0].mxu0 %v425
      %v658 = vpop.f32.mrb[0].mxu0
      %v659 = vadd.f32 %v313, %v658
      %v660 = vpop.f32.mrb[0].mxu0
      %v661 = vpop.f32.mrb[0].mxu0
      %v662 = vadd.f32 %v313, %v661
      %v663 = vpop.f32.mrb[0].mxu0
      %664 = vmatprep.mubr.bf16.mxu0 %v545
      %665 = vmatmul.mubr.bf16.gmra.mrb[0].mxu0 %v427
      %v666 = vpop.f32.mrb[0].mxu0
      %v667 = vadd.f32 %v313, %v666
      %v668 = vpop.f32.mrb[0].mxu0
      %v669 = vpop.f32.mrb[0].mxu0
      %v670 = vadd.f32 %v313, %v669
      %v671 = vpop.f32.mrb[0].mxu0
      %672 = vmatprep.mubr.bf16.mxu0 %v548
      %673 = vmatmul.mubr.bf16.gmra.mrb[0].mxu0 %v429
      %v674 = vpop.f32.mrb[0].mxu0
      %v675 = vadd.f32 %v313, %v674
      %v676 = vpop.f32.mrb[0].mxu0
      %v677 = vpop.f32.mrb[0].mxu0
      %v678 = vadd.f32 %v313, %v677
      %v679 = vpop.f32.mrb[0].mxu0
      %680 = vmatprep.mubr.bf16.mxu0 %v551
      %681 = vmatmul.mubr.bf16.gmra.mrb[0].mxu0 %v431
      %v682 = vpop.f32.mrb[0].mxu0
      %v683 = vadd.f32 %v313, %v682
      %v684 = vpop.f32.mrb[0].mxu0
      %v685 = vpop.f32.mrb[0].mxu0
      %v686 = vadd.f32 %v313, %v685
      %v687 = vpop.f32.mrb[0].mxu0
      %688 = vmatprep.mubr.bf16.mxu0 %v554
      %689 = vmatmul.mubr.bf16.gmra.mrb[0].mxu0 %v433
      %v690 = vpop.f32.mrb[0].mxu0
      %v691 = vadd.f32 %v313, %v690
      %v692 = vpop.f32.mrb[0].mxu0
      %v693 = vpop.f32.mrb[0].mxu0
      %v694 = vadd.f32 %v313, %v693
      %v695 = vpop.f32.mrb[0].mxu0
      %696 = vmatprep.mubr.bf16.mxu0 %v557
      %697 = vmatmul.mubr.bf16.gmra.mrb[0].mxu0 %v435
      %v698 = vpop.f32.mrb[0].mxu0
      %v699 = vadd.f32 %v313, %v698
      %v700 = vpop.f32.mrb[0].mxu0
      %v701 = vpop.f32.mrb[0].mxu0
      %v702 = vadd.f32 %v313, %v701
      %v703 = vpop.f32.mrb[0].mxu0
      %704 = vmatprep.mubr.bf16.mxu0 %v560
      %705 = vmatmul.mubr.bf16.gmra.mrb[0].mxu0 %v437
      %v706 = vpop.f32.mrb[0].mxu0
      %v707 = vadd.f32 %v313, %v706
      %v708 = vpop.f32.mrb[0].mxu0
      %v709 = vpop.f32.mrb[0].mxu0
      %v710 = vadd.f32 %v313, %v709
      %v711 = vpop.f32.mrb[0].mxu0
      %712 = vmatprep.mubr.bf16.mxu0 %v563
      %713 = vmatmul.mubr.bf16.gmra.mrb[0].mxu0 %v439
      %v714 = vpop.f32.mrb[0].mxu0
      %v715 = vadd.f32 %v313, %v714
      %v716 = vpop.f32.mrb[0].mxu0
      %v717 = vpop.f32.mrb[0].mxu0
      %v718 = vadd.f32 %v313, %v717
      %v719 = vpop.f32.mrb[0].mxu0
      %720 = vmatprep.mubr.bf16.mxu0 %v566
      %721 = vmatmul.mubr.bf16.gmra.mrb[0].mxu0 %v441
      %v722 = vpop.f32.mrb[0].mxu0
      %v723 = vadd.f32 %v313, %v722
      %v724 = vpop.f32.mrb[0].mxu0
      %v725 = vpop.f32.mrb[0].mxu0
      %v726 = vadd.f32 %v313, %v725
      %v727 = vpop.f32.mrb[0].mxu0
      %728 = vdwg.mxu0
      %v729 = vmax.f32 %v603, 0.0
      %v730 = vmax.f32 %v606, 0.0
      %v731 = vmax.f32 %v611, 0.0
      %v732 = vmax.f32 %v614, 0.0
      %v733 = vmax.f32 %v619, 0.0
      %v734 = vmax.f32 %v622, 0.0
      %v735 = vmax.f32 %v627, 0.0
      %v736 = vmax.f32 %v630, 0.0
      %v737 = vmax.f32 %v635, 0.0
      %v738 = vmax.f32 %v638, 0.0
      %v739 = vmax.f32 %v643, 0.0
      %v740 = vmax.f32 %v646, 0.0
      %v741 = vmax.f32 %v651, 0.0
      %v742 = vmax.f32 %v654, 0.0
      %v743 = vmax.f32 %v659, 0.0
      %v744 = vmax.f32 %v662, 0.0
      %v745 = vmax.f32 %v667, 0.0
      %v746 = vmax.f32 %v670, 0.0
      %v747 = vmax.f32 %v675, 0.0
      %v748 = vmax.f32 %v678, 0.0
      %v749 = vmax.f32 %v683, 0.0
      %v750 = vmax.f32 %v686, 0.0
      %v751 = vmax.f32 %v691, 0.0
      %v752 = vmax.f32 %v694, 0.0
      %v753 = vmax.f32 %v699, 0.0
      %v754 = vmax.f32 %v702, 0.0
      %v755 = vmax.f32 %v707, 0.0
      %v756 = vmax.f32 %v710, 0.0
      %v757 = vmax.f32 %v715, 0.0
      %v758 = vmax.f32 %v718, 0.0
      %v759 = vmax.f32 %v723, 0.0
      %v760 = vmax.f32 %v726, 0.0
      %v761 = vld [vmem:[%s3] sm:$0xff]
      %v762 = vld [vmem:[%s3 + $0x8] sm:$0xff]
      %v763 = vld [vmem:[%s3 + $0x10] sm:$0xff]
      %v764 = vld [vmem:[%s3 + $0x18] sm:$0xff]
      %v765 = vmul.f32 %v729, %v761
      %v766 = vmul.f32 %v730, %v762
      %v767 = vmul.f32 %v731, %v763
      %v768 = vmul.f32 %v732, %v764
      %v769 = vmul.f32 %v733, %v761
      %v770 = vmul.f32 %v734, %v762
      %v771 = vmul.f32 %v735, %v763
      %v772 = vmul.f32 %v736, %v764
      %v773 = vmul.f32 %v737, %v761
      %v774 = vmul.f32 %v738, %v762
      %v775 = vmul.f32 %v739, %v763
      %v776 = vmul.f32 %v740, %v764
      %v777 = vmul.f32 %v741, %v761
      %v778 = vmul.f32 %v742, %v762
      %v779 = vmul.f32 %v743, %v763
      %v780 = vmul.f32 %v744, %v764
      %v781 = vmul.f32 %v745, %v761
      %v782 = vmul.f32 %v746, %v762
      %v783 = vmul.f32 %v747, %v763
      %v784 = vmul.f32 %v748, %v764
      %v785 = vmul.f32 %v749, %v761
      %v786 = vmul.f32 %v750, %v762
      %v787 = vmul.f32 %v751, %v763
      %v788 = vmul.f32 %v752, %v764
      %v789 = vmul.f32 %v753, %v761
      %v790 = vmul.f32 %v754, %v762
      %v791 = vmul.f32 %v755, %v763
      %v792 = vmul.f32 %v756, %v764
      %v793 = vmul.f32 %v757, %v761
      %v794 = vmul.f32 %v758, %v762
      %v795 = vmul.f32 %v759, %v763
      %v796 = vmul.f32 %v760, %v764
      %v797 = vmax.f32 %v765, %v766
      %v798 = vmax.f32 %v797, %v767
      %v799 = vmax.f32 %v798, %v768
      %v800 = vrot.slane %v799, 4
      %v801 = vmax.f32 %v799, %v800
      %v802 = vrot.slane %v801, 2
      %v803 = vmax.f32 %v801, %v802
      %v804 = vrot.slane %v803, 1
      %v805 = vmax.f32 %v803, %v804
      %v806 = vmax.f32 %v769, %v770
      %v807 = vmax.f32 %v806, %v771
      %v808 = vmax.f32 %v807, %v772
      %v809 = vrot.slane %v808, 4
      %v810 = vmax.f32 %v808, %v809
      %v811 = vrot.slane %v810, 2
      %v812 = vmax.f32 %v810, %v811
      %v813 = vrot.slane %v812, 1
      %v814 = vmax.f32 %v812, %v813
      %v815 = vmax.f32 %v773, %v774
      %v816 = vmax.f32 %v815, %v775
      %v817 = vmax.f32 %v816, %v776
      %v818 = vrot.slane %v817, 4
      %v819 = vmax.f32 %v817, %v818
      %v820 = vrot.slane %v819, 2
      %v821 = vmax.f32 %v819, %v820
      %v822 = vrot.slane %v821, 1
      %v823 = vmax.f32 %v821, %v822
      %v824 = vmax.f32 %v777, %v778
      %v825 = vmax.f32 %v824, %v779
      %v826 = vmax.f32 %v825, %v780
      %v827 = vrot.slane %v826, 4
      %v828 = vmax.f32 %v826, %v827
      %v829 = vrot.slane %v828, 2
      %v830 = vmax.f32 %v828, %v829
      %v831 = vrot.slane %v830, 1
      %v832 = vmax.f32 %v830, %v831
      %v833 = vmax.f32 %v781, %v782
      %v834 = vmax.f32 %v833, %v783
      %v835 = vmax.f32 %v834, %v784
      %v836 = vrot.slane %v835, 4
      %v837 = vmax.f32 %v835, %v836
      %v838 = vrot.slane %v837, 2
      %v839 = vmax.f32 %v837, %v838
      %v840 = vrot.slane %v839, 1
      %v841 = vmax.f32 %v839, %v840
      %v842 = vmax.f32 %v785, %v786
      %v843 = vmax.f32 %v842, %v787
      %v844 = vmax.f32 %v843, %v788
      %v845 = vrot.slane %v844, 4
      %v846 = vmax.f32 %v844, %v845
      %v847 = vrot.slane %v846, 2
      %v848 = vmax.f32 %v846, %v847
      %v849 = vrot.slane %v848, 1
      %v850 = vmax.f32 %v848, %v849
      %v851 = vmax.f32 %v789, %v790
      %v852 = vmax.f32 %v851, %v791
      %v853 = vmax.f32 %v852, %v792
      %v854 = vrot.slane %v853, 4
      %v855 = vmax.f32 %v853, %v854
      %v856 = vrot.slane %v855, 2
      %v857 = vmax.f32 %v855, %v856
      %v858 = vrot.slane %v857, 1
      %v859 = vmax.f32 %v857, %v858
      %v860 = vmax.f32 %v793, %v794
      %v861 = vmax.f32 %v860, %v795
      %v862 = vmax.f32 %v861, %v796
      %v863 = vrot.slane %v862, 4
      %v864 = vmax.f32 %v862, %v863
      %v865 = vrot.slane %v864, 2
      %v866 = vmax.f32 %v864, %v865
      %v867 = vrot.slane %v866, 1
      %v868 = vmax.f32 %v866, %v867
      %v869 = vpack.c.bf16 %v805, %v805
      %v870 = vpack.c.bf16 %v814, %v814
      %v871 = vpack.c.bf16 %v823, %v823
      %v872 = vpack.c.bf16 %v832, %v832
      %v873 = vpack.c.bf16 %v841, %v841
      %v874 = vpack.c.bf16 %v850, %v850
      %v875 = vpack.c.bf16 %v859, %v859
      %v876 = vpack.c.bf16 %v868, %v868
      %v877 = vld [vmem:[%s4] sm:$0xf]
      %v878 = vld [vmem:[%s4 + $0x4] sm:$0xf]
      %v879 = vld [vmem:[%s4 + $0x8] sm:$0xf]
      %v880 = vld [vmem:[%s4 + $0xc] sm:$0xf]
      %v881 = vld [vmem:[%s4 + $0x10] sm:$0xf]
      %v882 = vld [vmem:[%s4 + $0x14] sm:$0xf]
      %v883 = vld [vmem:[%s4 + $0x18] sm:$0xf]
      %v884 = vld [vmem:[%s4 + $0x1c] sm:$0xf]
      %v885 = vld [vmem:[%s4 + $0x20] sm:$0xf]
      %v886 = vld [vmem:[%s4 + $0x24] sm:$0xf]
      %v887 = vld [vmem:[%s4 + $0x28] sm:$0xf]
      %v888 = vld [vmem:[%s4 + $0x2c] sm:$0xf]
      %v889 = vld [vmem:[%s4 + $0x30] sm:$0xf]
      %v890 = vld [vmem:[%s4 + $0x34] sm:$0xf]
      %v891 = vld [vmem:[%s4 + $0x38] sm:$0xf]
      %v892 = vld [vmem:[%s4 + $0x3c] sm:$0xf]
      %v893 = vld [vmem:[%s5] sm:$0x1]
      %v895 = vlaneseq
      %v896 = vshrl.u32 %v895, 7
      %v897 = vsub.s32 0, %v896
      %v898 = vrot.slane %v893, %v897
      %v908 = vunpack.c.l.b16 %v869
      %v909 = vunpack.c.l.b16 %v870
      %v910 = vunpack.c.l.b16 %v871
      %v911 = vunpack.c.l.b16 %v872
      %v912 = vunpack.c.l.b16 %v873
      %v913 = vunpack.c.l.b16 %v874
      %v914 = vunpack.c.l.b16 %v875
      %v915 = vunpack.c.l.b16 %v876
      %vm916 = vcmask 1041409
      %v917 = vsel %vm916, %v909, %v908
      %vm918 = vcmask 1042434
      %v919 = vsel %vm918, %v910, %v917
      %vm920 = vcmask 1043459
      %v921 = vsel %vm920, %v911, %v919
      %vm922 = vcmask 1044484
      %v923 = vsel %vm922, %v912, %v921
      %vm924 = vcmask 1045509
      %v925 = vsel %vm924, %v913, %v923
      %vm926 = vcmask 1046534
      %v927 = vsel %vm926, %v914, %v925
      %vm928 = vcmask 1047559
      %v929 = vsel %vm928, %v915, %v927
      %v930 = vpack.c.b16 %v929, %v929
      %v948 = vunpack.c.l.b16 %v877
      %v949 = vunpack.c.l.b16 %v878
      %v950 = vunpack.c.l.b16 %v879
      %v951 = vunpack.c.l.b16 %v880
      %v952 = vunpack.c.l.b16 %v881
      %v953 = vunpack.c.l.b16 %v882
      %v954 = vunpack.c.l.b16 %v883
      %v955 = vunpack.c.l.b16 %v884
      %v956 = vunpack.c.l.b16 %v885
      %v957 = vunpack.c.l.b16 %v886
      %v958 = vunpack.c.l.b16 %v887
      %v959 = vunpack.c.l.b16 %v888
      %v960 = vunpack.c.l.b16 %v889
      %v961 = vunpack.c.l.b16 %v890
      %v962 = vunpack.c.l.b16 %v891
      %v963 = vunpack.c.l.b16 %v892
      %v964 = vpack.c.b16 %v949, %v948
      %v965 = vpack.c.b16 %v951, %v950
      %v966 = vpack.c.b16 %v953, %v952
      %v967 = vpack.c.b16 %v955, %v954
      %v968 = vpack.c.b16 %v957, %v956
      %v969 = vpack.c.b16 %v959, %v958
      %v970 = vpack.c.b16 %v961, %v960
      %v971 = vpack.c.b16 %v963, %v962
      %980 = vmatprep.subr.bf16.mxu0 0
      %981 = vmatpush1.bf16.msra.mxu0 %v964
      %982 = vmatprep.subr.bf16.mxu0 0
      %983 = vmatpush1.bf16.msra.mxu0 %v965
      %984 = vmatprep.subr.bf16.mxu0 0
      %985 = vmatpush1.bf16.msra.mxu0 %v966
      %986 = vmatprep.subr.bf16.mxu0 0
      %987 = vmatpush1.bf16.msra.mxu0 %v967
      %988 = vmatprep.subr.bf16.mxu0 0
      %989 = vmatpush1.bf16.msra.mxu0 %v968
      %990 = vmatprep.subr.bf16.mxu0 0
      %991 = vmatpush1.bf16.msra.mxu0 %v969
      %992 = vmatprep.subr.bf16.mxu0 0
      %993 = vmatpush1.bf16.msra.mxu0 %v970
      %994 = vmatprep.subr.bf16.mxu0 0
      %995 = vmatpush1.bf16.msra.mxu0 %v971
      %996 = vmatprep.subr.bf16.mxu0 0
      %997 = vmatpush1.bf16.msra.mxu0 0
      %998 = vmatprep.subr.bf16.mxu0 0
      %999 = vmatpush1.bf16.msra.mxu0 0
      %1000 = vmatprep.subr.bf16.mxu0 0
      %1001 = vmatpush1.bf16.msra.mxu0 0
      %1002 = vmatprep.subr.bf16.mxu0 0
      %1003 = vmatpush1.bf16.msra.mxu0 0
      %1004 = vmatprep.subr.bf16.mxu0 0
      %1005 = vmatpush1.bf16.msra.mxu0 0
      %1006 = vmatprep.subr.bf16.mxu0 0
      %1007 = vmatpush1.bf16.msra.mxu0 0
      %1008 = vmatprep.subr.bf16.mxu0 0
      %1009 = vmatpush1.bf16.msra.mxu0 0
      %1010 = vmatprep.subr.bf16.mxu0 0
      %1011 = vmatpush1.bf16.msra.mxu0 0
      %1012 = vmatprep.mubr.bf16.mxu0 0
      %1013 = vmatmul.mubr.bf16.gmra.mrb[0].mxu0 %v930
      %v1014 = vpop.f32.mrb[0].mxu0
      %v1015 = vadd.f32 %v898, %v1014
      %v1016 = vpop.f32.mrb[0].mxu0
      %v1017 = vpop.f32.mrb[0].mxu0
      %v1018 = vpop.f32.mrb[0].mxu0
      %1019 = vdwg.mxu0
      %1020 = vst [vmem:[%s254] sm:$0xff] %v1015
      %p1021 = scmp.lt.s32.totalorder %s17, 1
      %s1022 = scalar_select %p1021, %s17, 1
      %s1023 = smul.addr %s1022, 8
      %s1024 = scalar_lea.vmem %s6, %s1023
      // Predicated region
      $region45: #{_apply.1} parent=43 // pred_check
        %p1025 = pneg %p166
      $region46: #{_apply.1} parent=43 // pred_check_branch
        %1027 = sbr.rel (%p1025) target = $region48
      $region47: #{_apply.1} parent=43 // pred_region
        _
      $region48: #{_apply.1} parent=43 // pred_fallthru
        _
    $region44: #{_apply.1} parent=5 // pred_fallthru
      _
    %p1028 = scmp.le.s32.totalorder 2, %s12
    // Predicated region
    $region49: #{_apply.1} parent=5 // pred_check
      %p1029 = pneg %p1028
    $region50: #{_apply.1} parent=5 // pred_check_branch
      %1031 = sbr.rel (%p1029) target = $region52
    $region51: #{_apply.1} parent=5 // pred_region
      %s1032 = ssub.s32 %s12, 2
      // Predicated region
      $region53: #{_apply.1} parent=51 // pred_check
        %p1033 = pneg %p172
      $region54: #{_apply.1} parent=51 // pred_check_branch
        %1035 = sbr.rel (%p1033) target = $region56
      $region55: #{_apply.1} parent=51 // pred_region
        %p1036 = scmp.lt.s32.totalorder %s18, 1
        %s1037 = scalar_select %p1036, %s18, 1
        %s1038 = smul.addr %s1037, 8
        %s1039 = scalar_lea.vmem %s6, %s1038
      $region56: #{_apply.1} parent=51 // pred_fallthru
        _
    $region52: #{_apply.1} parent=5 // pred_fallthru
      _
  $region6: #{_apply.1} parent=0 // loop_footer
    %s16 = sadd.s32 1, %s12
  $region7: #{_apply.1} parent=0 // loop_footer_branch
    %11 = sbr.rel target = $region3
  $region8: #{_apply.1} parent=0 // loop_exit
    _

// kernel: _apply.1
$region0: #{_apply.1}
  #allocation0 [shape = 'u32[]', space=smem, size = 0x4, offset = 0x4, fixed_abs, tag = 'smem constant byte address 0x4 - core index']
  #allocation1 [shape = 'u32[144,128]{1,0:T(1,128)}', space=vmem, size = 0x12000, scoped, tag = 'internal scratch']
  %s0 = inlined_call_operand.vmem [shape: bf16[16,32,160], index: 0, kind: input, shape index: {}]
  %s1 = inlined_call_operand.vmem [shape: bf16[160,128], index: 1, kind: input, shape index: {}]
  %s2 = inlined_call_operand.vmem [shape: f32[1,128], index: 2, kind: input, shape index: {}]
  %s3 = inlined_call_operand.vmem [shape: f32[32,128], index: 3, kind: input, shape index: {}]
  %s4 = inlined_call_operand.vmem [shape: bf16[128,128], index: 4, kind: input, shape index: {}]
  %s5 = inlined_call_operand.vmem [shape: f32[1,128], index: 5, kind: input, shape index: {}]
  %s6 = inlined_call_operand.vmem [shape: f32[16,128], index: 6, kind: output, shape index: {}]
  %s7 = sld [smem:[#allocation0]]
  $region57: #{_apply.1} parent=0
    _
  %s9 = ssub.s32 1, %s7
  %s10 = scalar_select 0, %s9, %s7
  loop: start=0, step=1, limit=4
  $region2: #{_apply.1} parent=0 // loop_pre_header
    _
  $region3: #{_apply.1} parent=0 // loop_header
    %s12 = sphi 0, %s16
    %p13 = scmp.ge.s32.totalorder %s12, 4
    %s22 = sphi 0, %s24
    %s25 = sphi 0, %s22
    %s26 = sphi 0, %s25
    %s42 = sphi 0, %s26
    %s46 = sphi 0, %s46
    %s48 = sphi 0, %s46
    %s49 = sphi 0, %s48
    %s63 = sphi 0, %s49
    %s67 = sphi 0, %s67
    %s69 = sphi 0, %s67
    %s70 = sphi 0, %s69
    %s84 = sphi 0, %s70
    %s88 = sphi 0, %s88
    %s90 = sphi 0, %s88
    %s91 = sphi 0, %s90
    %s105 = sphi 0, %s91
    %s109 = sphi 0, %s109
    %s111 = sphi 0, %s109
    %s112 = sphi 0, %s111
    %s126 = sphi 0, %s112
    %s130 = sphi 0, %s130
    %s132 = sphi 0, %s130
    %s133 = sphi 0, %s132
    %s147 = sphi 0, %s133
    %s153 = sphi 0, %s155
    %s156 = sphi 0, %s153
    %s157 = sphi 0, %s156
    %s173 = sphi 0, %s157
  $region4: #{_apply.1} parent=0 // loop_header_branch
    %15 = sbr.rel (%p13) target = $region8
  $region5: #{_apply.1} parent=0 // loop_body
    %s17 = ssub.s32 %s12, 1
    %s18 = ssub.s32 %s12, 2
    %s19 = sadd.s32 %s12, 1
    %s20 = ssub.s32 %s12, %s19
    %p21 = scmp.eq.s32.totalorder %s20, 0
    %s23 = sadd.s32 %s22, 1
    %s24 = scalar_select %p21, %s22, %s23
    %p27 = pneg %p21
    %p28 = scmp.eq.s32.totalorder %s12, 1
    %p29 = por %p27, %p28
    %p30 = scmp.ne.s32.totalorder %s22, %s25
    %p31 = scmp.eq.s32.totalorder %s12, 0
    %p32 = por %p30, %p31
    %p33 = scmp.ne.s32.totalorder %s22, %s25
    %p34 = scmp.eq.s32.totalorder %s17, 1
    %p35 = por %p33, %p34
    %p36 = scmp.ne.s32.totalorder %s25, %s26
    %p37 = scmp.eq.s32.totalorder %s17, 0
    %p38 = por %p36, %p37
    %p39 = scmp.ne.s32.totalorder %s25, %s26
    %p40 = scmp.eq.s32.totalorder %s18, 1
    %p41 = por %p39, %p40
    %p43 = scmp.ne.s32.totalorder %s26, %s42
    %p44 = scmp.eq.s32.totalorder %s18, 0
    %p45 = por %p43, %p44
    %s47 = sadd.s32 %s46, 1
    %p50 = scmp.eq.s32.totalorder %s12, 1
    %p51 = scmp.ne.s32.totalorder %s46, %s48
    %p52 = scmp.eq.s32.totalorder %s12, 0
    %p53 = por %p51, %p52
    %p54 = scmp.ne.s32.totalorder %s46, %s48
    %p55 = scmp.eq.s32.totalorder %s17, 1
    %p56 = por %p54, %p55
    %p57 = scmp.ne.s32.totalorder %s48, %s49
    %p58 = scmp.eq.s32.totalorder %s17, 0
    %p59 = por %p57, %p58
    %p60 = scmp.ne.s32.totalorder %s48, %s49
    %p61 = scmp.eq.s32.totalorder %s18, 1
    %p62 = por %p60, %p61
    %p64 = scmp.ne.s32.totalorder %s49, %s63
    %p65 = scmp.eq.s32.totalorder %s18, 0
    %p66 = por %p64, %p65
    %s68 = sadd.s32 %s67, 1
    %p71 = scmp.eq.s32.totalorder %s12, 1
    %p72 = scmp.ne.s32.totalorder %s67, %s69
    %p73 = scmp.eq.s32.totalorder %s12, 0
    %p74 = por %p72, %p73
    %p75 = scmp.ne.s32.totalorder %s67, %s69
    %p76 = scmp.eq.s32.totalorder %s17, 1
    %p77 = por %p75, %p76
    %p78 = scmp.ne.s32.totalorder %s69, %s70
    %p79 = scmp.eq.s32.totalorder %s17, 0
    %p80 = por %p78, %p79
    %p81 = scmp.ne.s32.totalorder %s69, %s70
    %p82 = scmp.eq.s32.totalorder %s18, 1
    %p83 = por %p81, %p82
    %p85 = scmp.ne.s32.totalorder %s70, %s84
    %p86 = scmp.eq.s32.totalorder %s18, 0
    %p87 = por %p85, %p86
    %s89 = sadd.s32 %s88, 1
    %p92 = scmp.eq.s32.totalorder %s12, 1
    %p93 = scmp.ne.s32.totalorder %s88, %s90
    %p94 = scmp.eq.s32.totalorder %s12, 0
    %p95 = por %p93, %p94
    %p96 = scmp.ne.s32.totalorder %s88, %s90
    %p97 = scmp.eq.s32.totalorder %s17, 1
    %p98 = por %p96, %p97
    %p99 = scmp.ne.s32.totalorder %s90, %s91
    %p100 = scmp.eq.s32.totalorder %s17, 0
    %p101 = por %p99, %p100
    %p102 = scmp.ne.s32.totalorder %s90, %s91
    %p103 = scmp.eq.s32.totalorder %s18, 1
    %p104 = por %p102, %p103
    %p106 = scmp.ne.s32.totalorder %s91, %s105
    %p107 = scmp.eq.s32.totalorder %s18, 0
    %p108 = por %p106, %p107
    %s110 = sadd.s32 %s109, 1
    %p113 = scmp.eq.s32.totalorder %s12, 1
    %p114 = scmp.ne.s32.totalorder %s109, %s111
    %p115 = scmp.eq.s32.totalorder %s12, 0
    %p116 = por %p114, %p115
    %p117 = scmp.ne.s32.totalorder %s109, %s111
    %p118 = scmp.eq.s32.totalorder %s17, 1
    %p119 = por %p117, %p118
    %p120 = scmp.ne.s32.totalorder %s111, %s112
    %p121 = scmp.eq.s32.totalorder %s17, 0
    %p122 = por %p120, %p121
    %p123 = scmp.ne.s32.totalorder %s111, %s112
    %p124 = scmp.eq.s32.totalorder %s18, 1
    %p125 = por %p123, %p124
    %p127 = scmp.ne.s32.totalorder %s112, %s126
    %p128 = scmp.eq.s32.totalorder %s18, 0
    %p129 = por %p127, %p128
    %s131 = sadd.s32 %s130, 1
    %p134 = scmp.eq.s32.totalorder %s12, 1
    %p135 = scmp.ne.s32.totalorder %s130, %s132
    %p136 = scmp.eq.s32.totalorder %s12, 0
    %p137 = por %p135, %p136
    %p138 = scmp.ne.s32.totalorder %s130, %s132
    %p139 = scmp.eq.s32.totalorder %s17, 1
    %p140 = por %p138, %p139
    %p141 = scmp.ne.s32.totalorder %s132, %s133
    %p142 = scmp.eq.s32.totalorder %s17, 0
    %p143 = por %p141, %p142
    %p144 = scmp.ne.s32.totalorder %s132, %s133
    %p145 = scmp.eq.s32.totalorder %s18, 1
    %p146 = por %p144, %p145
    %p148 = scmp.ne.s32.totalorder %s133, %s147
    %p149 = scmp.eq.s32.totalorder %s18, 0
    %p150 = por %p148, %p149
    %s151 = ssub.s32 %s12, %s19
    %p152 = scmp.eq.s32.totalorder %s151, 0
    %s154 = sadd.s32 %s153, 1
    %s155 = scalar_select %p152, %s153, %s154
    %p158 = pneg %p152
    %p159 = scmp.eq.s32.totalorder %s12, 1
    %p160 = por %p158, %p159
    %p161 = scmp.ne.s32.totalorder %s153, %s156
    %p162 = scmp.eq.s32.totalorder %s12, 0
    %p163 = por %p161, %p162
    %p164 = scmp.ne.s32.totalorder %s153, %s156
    %p165 = scmp.eq.s32.totalorder %s17, 1
    %p166 = por %p164, %p165
    %p167 = scmp.ne.s32.totalorder %s156, %s157
    %p168 = scmp.eq.s32.totalorder %s17, 0
    %p169 = por %p167, %p168
    %p170 = scmp.ne.s32.totalorder %s156, %s157
    %p171 = scmp.eq.s32.totalorder %s18, 1
    %p172 = por %p170, %p171
    %p174 = scmp.ne.s32.totalorder %s157, %s173
    %p175 = scmp.eq.s32.totalorder %s18, 0
    %p176 = por %p174, %p175
    %p177 = scmp.le.s32.totalorder 1, %s12
    %p178 = scmp.lt.s32.totalorder %s12, 3
    %p179 = pnand %p177, %p178
    %p180 = pneg %p179
    // Predicated region
    $region9: #{_apply.1} parent=5 // pred_check
      _
    $region10: #{_apply.1} parent=5 // pred_check_branch
      %182 = sbr.rel (%p179) target = $region12
    $region11: #{_apply.1} parent=5 // pred_region
      %s183 = ssub.s32 %s12, 1
      // Predicated region
      $region13: #{_apply.1} parent=11 // pred_check
        %p184 = pneg %p59
      $region14: #{_apply.1} parent=11 // pred_check_branch
        %186 = sbr.rel (%p184) target = $region16
      $region15: #{_apply.1} parent=11 // pred_region
        _
      $region16: #{_apply.1} parent=11 // pred_fallthru
        _
      // Predicated region
      $region17: #{_apply.1} parent=11 // pred_check
        %p187 = pneg %p80
      $region18: #{_apply.1} parent=11 // pred_check_branch
        %189 = sbr.rel (%p187) target = $region20
      $region19: #{_apply.1} parent=11 // pred_region
        _
      $region20: #{_apply.1} parent=11 // pred_fallthru
        _
      // Predicated region
      $region21: #{_apply.1} parent=11 // pred_check
        %p190 = pneg %p101
      $region22: #{_apply.1} parent=11 // pred_check_branch
        %192 = sbr.rel (%p190) target = $region24
      $region23: #{_apply.1} parent=11 // pred_region
        _
      $region24: #{_apply.1} parent=11 // pred_fallthru
        _
      // Predicated region
      $region25: #{_apply.1} parent=11 // pred_check
        %p193 = pneg %p122
      $region26: #{_apply.1} parent=11 // pred_check_branch
        %195 = sbr.rel (%p193) target = $region28
      $region27: #{_apply.1} parent=11 // pred_region
        _
      $region28: #{_apply.1} parent=11 // pred_fallthru
        _
      // Predicated region
      $region29: #{_apply.1} parent=11 // pred_check
        %p196 = pneg %p143
      $region30: #{_apply.1} parent=11 // pred_check_branch
        %198 = sbr.rel (%p196) target = $region32
      $region31: #{_apply.1} parent=11 // pred_region
        _
      $region32: #{_apply.1} parent=11 // pred_fallthru
        _
    $region12: #{_apply.1} parent=5 // pred_fallthru
      _
    %p199 = scmp.lt.s32.totalorder %s12, 2
    // Predicated region
    $region33: #{_apply.1} parent=5 // pred_check
      %p200 = pneg %p199
    $region34: #{_apply.1} parent=5 // pred_check_branch
      %202 = sbr.rel (%p200) target = $region36
    $region35: #{_apply.1} parent=5 // pred_region
      // Predicated region
      $region37: #{_apply.1} parent=35 // pred_check
        %p203 = pneg %p32
      $region38: #{_apply.1} parent=35 // pred_check_branch
        %205 = sbr.rel (%p203) target = $region40
      $region39: #{_apply.1} parent=35 // pred_region
        %s206 = smul.u32 8, %s12
        %p207 = scmp.lt.s32.totalorder %s206, 15
        %s208 = scalar_select %p207, %s206, 15
        %s209 = smul.addr %s208, 8
        %s210 = smul.addr %s209, 4
        %s211 = scalar_lea.vmem %s0, %s210
        %s212 = smul.u32 8, %s12
      $region40: #{_apply.1} parent=35 // pred_fallthru
        _
    $region36: #{_apply.1} parent=5 // pred_fallthru
      _
    %p213 = scmp.le.s32.totalorder 1, %s12
    %p214 = scmp.lt.s32.totalorder %s12, 3
    %p215 = pnand %p213, %p214
    %p216 = pneg %p215
    // Predicated region
    $region41: #{_apply.1} parent=5 // pred_check
      _
    $region42: #{_apply.1} parent=5 // pred_check_branch
      %218 = sbr.rel (%p215) target = $region44
    $region43: #{_apply.1} parent=5 // pred_region
      %s219 = ssub.s32 %s12, 1
      %s220 = smul.u32 8, %s17
      %p221 = scmp.lt.s32.totalorder %s220, 15
      %s222 = scalar_select %p221, %s220, 15
      %s223 = smul.addr %s222, 8
      %s224 = smul.addr %s223, 4
      %s225 = scalar_lea.vmem %s0, %s224
      %p226 = pneg %p38
      %p227 = pneg %p35
      %p228 = pneg %p59
      %p229 = pneg %p56
      %p230 = pneg %p80
      %p231 = pneg %p77
      %p232 = pneg %p101
      %p233 = pneg %p98
      %p234 = pneg %p122
      %p235 = pneg %p119
      %p236 = pneg %p143
      %p237 = pneg %p140
      %p238 = pneg %p169
      %p239 = pneg %p166
      %p240 = scmp.lt.s32.totalorder %s17, 1
      %s241 = scalar_select %p240, %s17, 1
      %s242 = smul.addr %s241, 8
      %s243 = scalar_lea.vmem %s6, %s242
      %s244 = smul.u32 8, %s17
      %p245 = scmp.lt.s32.totalorder %s244, 15
      %s246 = scalar_select %p245, %s244, 15
      %s247 = smul.addr %s246, 8
      %s248 = smul.addr %s247, 4
      %s249 = scalar_lea.vmem %s0, %s248
      %s250 = smul.u32 8, %s17
      %p251 = scmp.lt.s32.totalorder %s17, 1
      %s252 = scalar_select %p251, %s17, 1
      %s253 = smul.addr %s252, 8
      %s254 = scalar_lea.vmem %s6, %s253
      %v256 = vld [vmem:[%s249] sm:$0xff]
      %v257 = vld [vmem:[%s249 + $0x8] sm:$0xff]
      %v258 = vld [vmem:[%s249 + $0x10] sm:$0xff]
      %v259 = vld [vmem:[%s249 + $0x18] sm:$0xff]
      %v260 = vld [vmem:[%s249 + $0x20] sm:$0xff]
      %v261 = vld [vmem:[%s249 + $0x28] sm:$0xff]
      %v262 = vld [vmem:[%s249 + $0x30] sm:$0xff]
      %v263 = vld [vmem:[%s249 + $0x38] sm:$0xff]
      %v264 = vld [vmem:[%s249 + $0x40] sm:$0xff]
      %v265 = vld [vmem:[%s249 + $0x48] sm:$0xff]
      %v266 = vld [vmem:[%s249 + $0x50] sm:$0xff]
      %v267 = vld [vmem:[%s249 + $0x58] sm:$0xff]
      %v268 = vld [vmem:[%s249 + $0x60] sm:$0xff]
      %v269 = vld [vmem:[%s249 + $0x68] sm:$0xff]
      %v270 = vld [vmem:[%s249 + $0x70] sm:$0xff]
      %v271 = vld [vmem:[%s249 + $0x78] sm:$0xff]
      %v272 = vld [vmem:[%s249 + $0x80] sm:$0xff]
      %v273 = vld [vmem:[%s249 + $0x88] sm:$0xff]
      %v274 = vld [vmem:[%s249 + $0x90] sm:$0xff]
      %v275 = vld [vmem:[%s249 + $0x98] sm:$0xff]
      %v276 = vld [vmem:[%s249 + $0xa0] sm:$0xff]
      %v277 = vld [vmem:[%s249 + $0xa8] sm:$0xff]
      %v278 = vld [vmem:[%s249 + $0xb0] sm:$0xff]
      %v279 = vld [vmem:[%s249 + $0xb8] sm:$0xff]
      %v280 = vld [vmem:[%s249 + $0xc0] sm:$0xff]
      %v281 = vld [vmem:[%s249 + $0xc8] sm:$0xff]
      %v282 = vld [vmem:[%s249 + $0xd0] sm:$0xff]
      %v283 = vld [vmem:[%s249 + $0xd8] sm:$0xff]
      %v284 = vld [vmem:[%s249 + $0xe0] sm:$0xff]
      %v285 = vld [vmem:[%s249 + $0xe8] sm:$0xff]
      %v286 = vld [vmem:[%s249 + $0xf0] sm:$0xff]
      %v287 = vld [vmem:[%s249 + $0xf8] sm:$0xff]
      %v288 = vld [vmem:[%s1] sm:$0xf]
      %v289 = vld [vmem:[%s1 + $0x4] sm:$0xf]
      %v290 = vld [vmem:[%s1 + $0x8] sm:$0xf]
      %v291 = vld [vmem:[%s1 + $0xc] sm:$0xf]
      %v292 = vld [vmem:[%s1 + $0x10] sm:$0xf]
      %v293 = vld [vmem:[%s1 + $0x14] sm:$0xf]
      %v294 = vld [vmem:[%s1 + $0x18] sm:$0xf]
      %v295 = vld [vmem:[%s1 + $0x1c] sm:$0xf]
      %v296 = vld [vmem:[%s1 + $0x20] sm:$0xf]
      %v297 = vld [vmem:[%s1 + $0x24] sm:$0xf]
      %v298 = vld [vmem:[%s1 + $0x28] sm:$0xf]
      %v299 = vld [vmem:[%s1 + $0x2c] sm:$0xf]
      %v300 = vld [vmem:[%s1 + $0x30] sm:$0xf]
      %v301 = vld [vmem:[%s1 + $0x34] sm:$0xf]
      %v302 = vld [vmem:[%s1 + $0x38] sm:$0xf]
      %v303 = vld [vmem:[%s1 + $0x3c] sm:$0xf]
      %v304 = vld [vmem:[%s1 + $0x40] sm:$0xf]
      %v305 = vld [vmem:[%s1 + $0x44] sm:$0xf]
      %v306 = vld [vmem:[%s1 + $0x48] sm:$0xf]
      %v307 = vld [vmem:[%s1 + $0x4c] sm:$0xf]
      %v308 = vld [vmem:[%s2] sm:$0x1]
      %v310 = vlaneseq
      %v311 = vshrl.u32 %v310, 7
      %v312 = vsub.s32 0, %v311
      %v313 = vrot.slane %v308, %v312
      %v347 = vunpack.c.l.b16 %v256
      %v348 = vunpack.c.h.b16 %v256
      %v349 = vunpack.c.l.b16 %v257
      %v350 = vunpack.c.h.b16 %v257
      %v351 = vunpack.c.l.b16 %v258
      %v352 = vunpack.c.h.b16 %v258
      %v353 = vunpack.c.l.b16 %v259
      %v354 = vunpack.c.h.b16 %v259
      %v355 = vunpack.c.l.b16 %v260
      %v356 = vunpack.c.h.b16 %v260
      %v357 = vunpack.c.l.b16 %v261
      %v358 = vunpack.c.h.b16 %v261
      %v359 = vunpack.c.l.b16 %v262
      %v360 = vunpack.c.h.b16 %v262
      %v361 = vunpack.c.l.b16 %v263
      %v362 = vunpack.c.h.b16 %v263
      %v363 = vunpack.c.l.b16 %v264
      %v364 = vunpack.c.h.b16 %v264
      %v365 = vunpack.c.l.b16 %v265
      %v366 = vunpack.c.h.b16 %v265
      %v367 = vunpack.c.l.b16 %v266
      %v368 = vunpack.c.h.b16 %v266
      %v369 = vunpack.c.l.b16 %v267
      %v370 = vunpack.c.h.b16 %v267
      %v371 = vunpack.c.l.b16 %v268
      %v372 = vunpack.c.h.b16 %v268
      %v373 = vunpack.c.l.b16 %v269
      %v374 = vunpack.c.h.b16 %v269
      %v375 = vunpack.c.l.b16 %v270
      %v376 = vunpack.c.h.b16 %v270
      %v377 = vunpack.c.l.b16 %v271
      %v378 = vunpack.c.h.b16 %v271
      %v379 = vunpack.c.l.b16 %v272
      %v380 = vunpack.c.h.b16 %v272
      %v381 = vunpack.c.l.b16 %v273
      %v382 = vunpack.c.h.b16 %v273
      %v383 = vunpack.c.l.b16 %v274
      %v384 = vunpack.c.h.b16 %v274
      %v385 = vunpack.c.l.b16 %v275
      %v386 = vunpack.c.h.b16 %v275
      %v387 = vunpack.c.l.b16 %v276
      %v388 = vunpack.c.h.b16 %v276
      %v389 = vunpack.c.l.b16 %v277
      %v390 = vunpack.c.h.b16 %v277
      %v391 = vunpack.c.l.b16 %v278
      %v392 = vunpack.c.h.b16 %v278
      %v393 = vunpack.c.l.b16 %v279
      %v394 = vunpack.c.h.b16 %v279
      %v395 = vunpack.c.l.b16 %v280
      %v396 = vunpack.c.h.b16 %v280
      %v397 = vunpack.c.l.b16 %v281
      %v398 = vunpack.c.h.b16 %v281
      %v399 = vunpack.c.l.b16 %v282
      %v400 = vunpack.c.h.b16 %v282
      %v401 = vunpack.c.l.b16 %v283
      %v402 = vunpack.c.h.b16 %v283
      %v403 = vunpack.c.l.b16 %v284
      %v404 = vunpack.c.h.b16 %v284
      %v405 = vunpack.c.l.b16 %v285
      %v406 = vunpack.c.h.b16 %v285
      %v407 = vunpack.c.l.b16 %v286
      %v408 = vunpack.c.h.b16 %v286
      %v409 = vunpack.c.l.b16 %v287
      %v410 = vunpack.c.h.b16 %v287
      %v411 = vpack.c.b16 %v349, %v347
      %v412 = vpack.c.b16 %v350, %v348
      %v413 = vpack.c.b16 %v353, %v351
      %v414 = vpack.c.b16 %v354, %v352
      %v415 = vpack.c.b16 %v357, %v355
      %v416 = vpack.c.b16 %v358, %v356
      %v417 = vpack.c.b16 %v361, %v359
      %v418 = vpack.c.b16 %v362, %v360
      %v419 = vpack.c.b16 %v365, %v363
      %v420 = vpack.c.b16 %v366, %v364
      %v421 = vpack.c.b16 %v369, %v367
      %v422 = vpack.c.b16 %v370, %v368
      %v423 = vpack.c.b16 %v373, %v371
      %v424 = vpack.c.b16 %v374, %v372
      %v425 = vpack.c.b16 %v377, %v375
      %v426 = vpack.c.b16 %v378, %v376
      %v427 = vpack.c.b16 %v381, %v379
      %v428 = vpack.c.b16 %v382, %v380
      %v429 = vpack.c.b16 %v385, %v383
      %v430 = vpack.c.b16 %v386, %v384
      %v431 = vpack.c.b16 %v389, %v387
      %v432 = vpack.c.b16 %v390, %v388
      %v433 = vpack.c.b16 %v393, %v391
      %v434 = vpack.c.b16 %v394, %v392
      %v435 = vpack.c.b16 %v397, %v395
      %v436 = vpack.c.b16 %v398, %v396
      %v437 = vpack.c.b16 %v401, %v399
      %v438 = vpack.c.b16 %v402, %v400
      %v439 = vpack.c.b16 %v405, %v403
      %v440 = vpack.c.b16 %v406, %v404
      %v441 = vpack.c.b16 %v409, %v407
      %v442 = vpack.c.b16 %v410, %v408
      %v479 = vunpack.c.l.b16 %v288
      %v480 = vunpack.c.l.b16 %v289
      %v481 = vunpack.c.l.b16 %v290
      %v482 = vunpack.c.l.b16 %v291
      %v483 = vunpack.c.l.b16 %v292
      %v484 = vunpack.c.l.b16 %v293
      %v485 = vunpack.c.l.b16 %v294
      %v486 = vunpack.c.l.b16 %v295
      %v487 = vunpack.c.l.b16 %v296
      %v488 = vunpack.c.l.b16 %v297
      %v489 = vunpack.c.l.b16 %v298
      %v490 = vunpack.c.l.b16 %v299
      %v491 = vunpack.c.l.b16 %v300
      %v492 = vunpack.c.l.b16 %v301
      %v493 = vunpack.c.l.b16 %v302
      %v494 = vunpack.c.l.b16 %v303
      %v495 = vunpack.c.l.b16 %v304
      %v496 = vunpack.c.l.b16 %v305
      %v497 = vunpack.c.l.b16 %v306
      %v498 = vunpack.c.l.b16 %v307
      %v499 = vpack.c.b16 %v480, %v479
      %v500 = vpack.c.b16 %v482, %v481
      %v501 = vpack.c.b16 %v484, %v483
      %v502 = vpack.c.b16 %v486, %v485
      %v503 = vpack.c.b16 %v488, %v487
      %v504 = vpack.c.b16 %v490, %v489
      %v505 = vpack.c.b16 %v492, %v491
      %v506 = vpack.c.b16 %v494, %v493
      %v507 = vpack.c.b16 %v496, %v495
      %v508 = vpack.c.b16 %v498, %v497
      %vm519 = vcmask 261120
      %v521 = vsel %vm519, %v412, 0
      %v524 = vsel %vm519, %v414, 0
      %v527 = vsel %vm519, %v416, 0
      %v530 = vsel %vm519, %v418, 0
      %v533 = vsel %vm519, %v420, 0
      %v536 = vsel %vm519, %v422, 0
      %v539 = vsel %vm519, %v424, 0
      %v542 = vsel %vm519, %v426, 0
      %v545 = vsel %vm519, %v428, 0
      %v548 = vsel %vm519, %v430, 0
      %v551 = vsel %vm519, %v432, 0
      %v554 = vsel %vm519, %v434, 0
      %v557 = vsel %vm519, %v436, 0
      %v560 = vsel %vm519, %v438, 0
      %v563 = vsel %vm519, %v440, 0
      %v566 = vsel %vm519, %v442, 0
      %568 = vmatprep.subr.bf16.mxu0 0
      %569 = vmatpush1.bf16.msra.mxu0 %v499
      %570 = vmatprep.subr.bf16.mxu0 0
      %571 = vmatpush1.bf16.msra.mxu0 %v500
      %572 = vmatprep.subr.bf16.mxu0 0
      %573 = vmatpush1.bf16.msra.mxu0 %v501
      %574 = vmatprep.subr.bf16.mxu0 0
      %575 = vmatpush1.bf16.msra.mxu0 %v502
      %576 = vmatprep.subr.bf16.mxu0 0
      %577 = vmatpush1.bf16.msra.mxu0 %v503
      %578 = vmatprep.subr.bf16.mxu0 0
      %579 = vmatpush1.bf16.msra.mxu0 %v504
      %580 = vmatprep.subr.bf16.mxu0 0
      %581 = vmatpush1.bf16.msra.mxu0 %v505
      %582 = vmatprep.subr.bf16.mxu0 0
      %583 = vmatpush1.bf16.msra.mxu0 %v506
      %584 = vmatprep.subr.bf16.mxu0 0
      %585 = vmatpush1.bf16.msra.mxu0 %v507
      %586 = vmatprep.subr.bf16.mxu0 0
      %587 = vmatpush1.bf16.msra.mxu0 %v508
      %588 = vmatprep.subr.bf16.mxu0 0
      %589 = vmatpush1.bf16.msra.mxu0 0
      %590 = vmatprep.subr.bf16.mxu0 0
      %591 = vmatpush1.bf16.msra.mxu0 0
      %592 = vmatprep.subr.bf16.mxu0 0
      %593 = vmatpush1.bf16.msra.mxu0 0
      %594 = vmatprep.subr.bf16.mxu0 0
      %595 = vmatpush1.bf16.msra.mxu0 0
      %596 = vmatprep.subr.bf16.mxu0 0
      %597 = vmatpush1.bf16.msra.mxu0 0
      %598 = vmatprep.subr.bf16.mxu0 0
      %599 = vmatpush1.bf16.msra.mxu0 0
      %600 = vmatprep.mubr.bf16.mxu0 %v521
      %601 = vmatmul.mubr.bf16.gmra.mrb[0].mxu0 %v411
      %v602 = vpop.f32.mrb[0].mxu0
      %v603 = vadd.f32 %v313, %v602
      %v604 = vpop.f32.mrb[0].mxu0
      %v605 = vpop.f32.mrb[0].mxu0
      %v606 = vadd.f32 %v313, %v605
      %v607 = vpop.f32.mrb[0].mxu0
      %608 = vmatprep.mubr.bf16.mxu0 %v524
      %609 = vmatmul.mubr.bf16.gmra.mrb[0].mxu0 %v413
      %v610 = vpop.f32.mrb[0].mxu0
      %v611 = vadd.f32 %v313, %v610
      %v612 = vpop.f32.mrb[0].mxu0
      %v613 = vpop.f32.mrb[0].mxu0
      %v614 = vadd.f32 %v313, %v613
      %v615 = vpop.f32.mrb[0].mxu0
      %616 = vmatprep.mubr.bf16.mxu0 %v527
      %617 = vmatmul.mubr.bf16.gmra.mrb[0].mxu0 %v415
      %v618 = vpop.f32.mrb[0].mxu0
      %v619 = vadd.f32 %v313, %v618
      %v620 = vpop.f32.mrb[0].mxu0
      %v621 = vpop.f32.mrb[0].mxu0
      %v622 = vadd.f32 %v313, %v621
      %v623 = vpop.f32.mrb[0].mxu0
      %624 = vmatprep.mubr.bf16.mxu0 %v530
      %625 = vmatmul.mubr.bf16.gmra.mrb[0].mxu0 %v417
      %v626 = vpop.f32.mrb[0].mxu0
      %v627 = vadd.f32 %v313, %v626
      %v628 = vpop.f32.mrb[0].mxu0
      %v629 = vpop.f32.mrb[0].mxu0
      %v630 = vadd.f32 %v313, %v629
      %v631 = vpop.f32.mrb[0].mxu0
      %632 = vmatprep.mubr.bf16.mxu0 %v533
      %633 = vmatmul.mubr.bf16.gmra.mrb[0].mxu0 %v419
      %v634 = vpop.f32.mrb[0].mxu0
      %v635 = vadd.f32 %v313, %v634
      %v636 = vpop.f32.mrb[0].mxu0
      %v637 = vpop.f32.mrb[0].mxu0
      %v638 = vadd.f32 %v313, %v637
      %v639 = vpop.f32.mrb[0].mxu0
      %640 = vmatprep.mubr.bf16.mxu0 %v536
      %641 = vmatmul.mubr.bf16.gmra.mrb[0].mxu0 %v421
      %v642 = vpop.f32.mrb[0].mxu0
      %v643 = vadd.f32 %v313, %v642
      %v644 = vpop.f32.mrb[0].mxu0
      %v645 = vpop.f32.mrb[0].mxu0
      %v646 = vadd.f32 %v313, %v645
      %v647 = vpop.f32.mrb[0].mxu0
      %648 = vmatprep.mubr.bf16.mxu0 %v539
      %649 = vmatmul.mubr.bf16.gmra.mrb[0].mxu0 %v423
      %v650 = vpop.f32.mrb[0].mxu0
      %v651 = vadd.f32 %v313, %v650
      %v652 = vpop.f32.mrb[0].mxu0
      %v653 = vpop.f32.mrb[0].mxu0
      %v654 = vadd.f32 %v313, %v653
      %v655 = vpop.f32.mrb[0].mxu0
      %656 = vmatprep.mubr.bf16.mxu0 %v542
      %657 = vmatmul.mubr.bf16.gmra.mrb[0].mxu0 %v425
      %v658 = vpop.f32.mrb[0].mxu0
      %v659 = vadd.f32 %v313, %v658
      %v660 = vpop.f32.mrb[0].mxu0
      %v661 = vpop.f32.mrb[0].mxu0
      %v662 = vadd.f32 %v313, %v661
      %v663 = vpop.f32.mrb[0].mxu0
      %664 = vmatprep.mubr.bf16.mxu0 %v545
      %665 = vmatmul.mubr.bf16.gmra.mrb[0].mxu0 %v427
      %v666 = vpop.f32.mrb[0].mxu0
      %v667 = vadd.f32 %v313, %v666
      %v668 = vpop.f32.mrb[0].mxu0
      %v669 = vpop.f32.mrb[0].mxu0
      %v670 = vadd.f32 %v313, %v669
      %v671 = vpop.f32.mrb[0].mxu0
      %672 = vmatprep.mubr.bf16.mxu0 %v548
      %673 = vmatmul.mubr.bf16.gmra.mrb[0].mxu0 %v429
      %v674 = vpop.f32.mrb[0].mxu0
      %v675 = vadd.f32 %v313, %v674
      %v676 = vpop.f32.mrb[0].mxu0
      %v677 = vpop.f32.mrb[0].mxu0
      %v678 = vadd.f32 %v313, %v677
      %v679 = vpop.f32.mrb[0].mxu0
      %680 = vmatprep.mubr.bf16.mxu0 %v551
      %681 = vmatmul.mubr.bf16.gmra.mrb[0].mxu0 %v431
      %v682 = vpop.f32.mrb[0].mxu0
      %v683 = vadd.f32 %v313, %v682
      %v684 = vpop.f32.mrb[0].mxu0
      %v685 = vpop.f32.mrb[0].mxu0
      %v686 = vadd.f32 %v313, %v685
      %v687 = vpop.f32.mrb[0].mxu0
      %688 = vmatprep.mubr.bf16.mxu0 %v554
      %689 = vmatmul.mubr.bf16.gmra.mrb[0].mxu0 %v433
      %v690 = vpop.f32.mrb[0].mxu0
      %v691 = vadd.f32 %v313, %v690
      %v692 = vpop.f32.mrb[0].mxu0
      %v693 = vpop.f32.mrb[0].mxu0
      %v694 = vadd.f32 %v313, %v693
      %v695 = vpop.f32.mrb[0].mxu0
      %696 = vmatprep.mubr.bf16.mxu0 %v557
      %697 = vmatmul.mubr.bf16.gmra.mrb[0].mxu0 %v435
      %v698 = vpop.f32.mrb[0].mxu0
      %v699 = vadd.f32 %v313, %v698
      %v700 = vpop.f32.mrb[0].mxu0
      %v701 = vpop.f32.mrb[0].mxu0
      %v702 = vadd.f32 %v313, %v701
      %v703 = vpop.f32.mrb[0].mxu0
      %704 = vmatprep.mubr.bf16.mxu0 %v560
      %705 = vmatmul.mubr.bf16.gmra.mrb[0].mxu0 %v437
      %v706 = vpop.f32.mrb[0].mxu0
      %v707 = vadd.f32 %v313, %v706
      %v708 = vpop.f32.mrb[0].mxu0
      %v709 = vpop.f32.mrb[0].mxu0
      %v710 = vadd.f32 %v313, %v709
      %v711 = vpop.f32.mrb[0].mxu0
      %712 = vmatprep.mubr.bf16.mxu0 %v563
      %713 = vmatmul.mubr.bf16.gmra.mrb[0].mxu0 %v439
      %v714 = vpop.f32.mrb[0].mxu0
      %v715 = vadd.f32 %v313, %v714
      %v716 = vpop.f32.mrb[0].mxu0
      %v717 = vpop.f32.mrb[0].mxu0
      %v718 = vadd.f32 %v313, %v717
      %v719 = vpop.f32.mrb[0].mxu0
      %720 = vmatprep.mubr.bf16.mxu0 %v566
      %721 = vmatmul.mubr.bf16.gmra.mrb[0].mxu0 %v441
      %v722 = vpop.f32.mrb[0].mxu0
      %v723 = vadd.f32 %v313, %v722
      %v724 = vpop.f32.mrb[0].mxu0
      %v725 = vpop.f32.mrb[0].mxu0
      %v726 = vadd.f32 %v313, %v725
      %v727 = vpop.f32.mrb[0].mxu0
      %728 = vdwg.mxu0
      %v729 = vmax.f32 %v603, 0.0
      %v730 = vmax.f32 %v606, 0.0
      %v731 = vmax.f32 %v611, 0.0
      %v732 = vmax.f32 %v614, 0.0
      %v733 = vmax.f32 %v619, 0.0
      %v734 = vmax.f32 %v622, 0.0
      %v735 = vmax.f32 %v627, 0.0
      %v736 = vmax.f32 %v630, 0.0
      %v737 = vmax.f32 %v635, 0.0
      %v738 = vmax.f32 %v638, 0.0
      %v739 = vmax.f32 %v643, 0.0
      %v740 = vmax.f32 %v646, 0.0
      %v741 = vmax.f32 %v651, 0.0
      %v742 = vmax.f32 %v654, 0.0
      %v743 = vmax.f32 %v659, 0.0
      %v744 = vmax.f32 %v662, 0.0
      %v745 = vmax.f32 %v667, 0.0
      %v746 = vmax.f32 %v670, 0.0
      %v747 = vmax.f32 %v675, 0.0
      %v748 = vmax.f32 %v678, 0.0
      %v749 = vmax.f32 %v683, 0.0
      %v750 = vmax.f32 %v686, 0.0
      %v751 = vmax.f32 %v691, 0.0
      %v752 = vmax.f32 %v694, 0.0
      %v753 = vmax.f32 %v699, 0.0
      %v754 = vmax.f32 %v702, 0.0
      %v755 = vmax.f32 %v707, 0.0
      %v756 = vmax.f32 %v710, 0.0
      %v757 = vmax.f32 %v715, 0.0
      %v758 = vmax.f32 %v718, 0.0
      %v759 = vmax.f32 %v723, 0.0
      %v760 = vmax.f32 %v726, 0.0
      %v761 = vld [vmem:[%s3] sm:$0xff]
      %v762 = vld [vmem:[%s3 + $0x8] sm:$0xff]
      %v763 = vld [vmem:[%s3 + $0x10] sm:$0xff]
      %v764 = vld [vmem:[%s3 + $0x18] sm:$0xff]
      %v765 = vmul.f32 %v729, %v761
      %v766 = vmul.f32 %v730, %v762
      %v767 = vmul.f32 %v731, %v763
      %v768 = vmul.f32 %v732, %v764
      %v769 = vmul.f32 %v733, %v761
      %v770 = vmul.f32 %v734, %v762
      %v771 = vmul.f32 %v735, %v763
      %v772 = vmul.f32 %v736, %v764
      %v773 = vmul.f32 %v737, %v761
      %v774 = vmul.f32 %v738, %v762
      %v775 = vmul.f32 %v739, %v763
      %v776 = vmul.f32 %v740, %v764
      %v777 = vmul.f32 %v741, %v761
      %v778 = vmul.f32 %v742, %v762
      %v779 = vmul.f32 %v743, %v763
      %v780 = vmul.f32 %v744, %v764
      %v781 = vmul.f32 %v745, %v761
      %v782 = vmul.f32 %v746, %v762
      %v783 = vmul.f32 %v747, %v763
      %v784 = vmul.f32 %v748, %v764
      %v785 = vmul.f32 %v749, %v761
      %v786 = vmul.f32 %v750, %v762
      %v787 = vmul.f32 %v751, %v763
      %v788 = vmul.f32 %v752, %v764
      %v789 = vmul.f32 %v753, %v761
      %v790 = vmul.f32 %v754, %v762
      %v791 = vmul.f32 %v755, %v763
      %v792 = vmul.f32 %v756, %v764
      %v793 = vmul.f32 %v757, %v761
      %v794 = vmul.f32 %v758, %v762
      %v795 = vmul.f32 %v759, %v763
      %v796 = vmul.f32 %v760, %v764
      %v797 = vmax.f32 %v765, %v766
      %v798 = vmax.f32 %v797, %v767
      %v799 = vmax.f32 %v798, %v768
      %v800 = vrot.slane %v799, 4
      %v801 = vmax.f32 %v799, %v800
      %v802 = vrot.slane %v801, 2
      %v803 = vmax.f32 %v801, %v802
      %v804 = vrot.slane %v803, 1
      %v805 = vmax.f32 %v803, %v804
      %v806 = vmax.f32 %v769, %v770
      %v807 = vmax.f32 %v806, %v771
      %v808 = vmax.f32 %v807, %v772
      %v809 = vrot.slane %v808, 4
      %v810 = vmax.f32 %v808, %v809
      %v811 = vrot.slane %v810, 2
      %v812 = vmax.f32 %v810, %v811
      %v813 = vrot.slane %v812, 1
      %v814 = vmax.f32 %v812, %v813
      %v815 = vmax.f32 %v773, %v774
      %v816 = vmax.f32 %v815, %v775
      %v817 = vmax.f32 %v816, %v776
      %v818 = vrot.slane %v817, 4
      %v819 = vmax.f32 %v817, %v818
      %v820 = vrot.slane %v819, 2
      %v821 = vmax.f32 %v819, %v820
      %v822 = vrot.slane %v821, 1
      %v823 = vmax.f32 %v821, %v822
      %v824 = vmax.f32 %v777, %v778
      %v825 = vmax.f32 %v824, %v779
      %v826 = vmax.f32 %v825, %v780
      %v827 = vrot.slane %v826, 4
      %v828 = vmax.f32 %v826, %v827
      %v829 = vrot.slane %v828, 2
      %v830 = vmax.f32 %v828, %v829
      %v831 = vrot.slane %v830, 1
      %v832 = vmax.f32 %v830, %v831
      %v833 = vmax.f32 %v781, %v782
      %v834 = vmax.f32 %v833, %v783
      %v835 = vmax.f32 %v834, %v784
      %v836 = vrot.slane %v835, 4
      %v837 = vmax.f32 %v835, %v836
      %v838 = vrot.slane %v837, 2
      %v839 = vmax.f32 %v837, %v838
      %v840 = vrot.slane %v839, 1
      %v841 = vmax.f32 %v839, %v840
      %v842 = vmax.f32 %v785, %v786
      %v843 = vmax.f32 %v842, %v787
      %v844 = vmax.f32 %v843, %v788
      %v845 = vrot.slane %v844, 4
      %v846 = vmax.f32 %v844, %v845
      %v847 = vrot.slane %v846, 2
      %v848 = vmax.f32 %v846, %v847
      %v849 = vrot.slane %v848, 1
      %v850 = vmax.f32 %v848, %v849
      %v851 = vmax.f32 %v789, %v790
      %v852 = vmax.f32 %v851, %v791
      %v853 = vmax.f32 %v852, %v792
      %v854 = vrot.slane %v853, 4
      %v855 = vmax.f32 %v853, %v854
      %v856 = vrot.slane %v855, 2
      %v857 = vmax.f32 %v855, %v856
      %v858 = vrot.slane %v857, 1
      %v859 = vmax.f32 %v857, %v858
      %v860 = vmax.f32 %v793, %v794
      %v861 = vmax.f32 %v860, %v795
      %v862 = vmax.f32 %v861, %v796
      %v863 = vrot.slane %v862, 4
      %v864 = vmax.f32 %v862, %v863
      %v865 = vrot.slane %v864, 2
      %v866 = vmax.f32 %v864, %v865
      %v867 = vrot.slane %v866, 1
      %v868 = vmax.f32 %v866, %v867
      %v869 = vpack.c.bf16 %v805, %v805
      %v870 = vpack.c.bf16 %v814, %v814
      %v871 = vpack.c.bf16 %v823, %v823
      %v872 = vpack.c.bf16 %v832, %v832
      %v873 = vpack.c.bf16 %v841, %v841
      %v874 = vpack.c.bf16 %v850, %v850
      %v875 = vpack.c.bf16 %v859, %v859
      %v876 = vpack.c.bf16 %v868, %v868
      %v877 = vld [vmem:[%s4] sm:$0xf]
      %v878 = vld [vmem:[%s4 + $0x4] sm:$0xf]
      %v879 = vld [vmem:[%s4 + $0x8] sm:$0xf]
      %v880 = vld [vmem:[%s4 + $0xc] sm:$0xf]
      %v881 = vld [vmem:[%s4 + $0x10] sm:$0xf]
      %v882 = vld [vmem:[%s4 + $0x14] sm:$0xf]
      %v883 = vld [vmem:[%s4 + $0x18] sm:$0xf]
      %v884 = vld [vmem:[%s4 + $0x1c] sm:$0xf]
      %v885 = vld [vmem:[%s4 + $0x20] sm:$0xf]
      %v886 = vld [vmem:[%s4 + $0x24] sm:$0xf]
      %v887 = vld [vmem:[%s4 + $0x28] sm:$0xf]
      %v888 = vld [vmem:[%s4 + $0x2c] sm:$0xf]
      %v889 = vld [vmem:[%s4 + $0x30] sm:$0xf]
      %v890 = vld [vmem:[%s4 + $0x34] sm:$0xf]
      %v891 = vld [vmem:[%s4 + $0x38] sm:$0xf]
      %v892 = vld [vmem:[%s4 + $0x3c] sm:$0xf]
      %v893 = vld [vmem:[%s5] sm:$0x1]
      %v895 = vlaneseq
      %v896 = vshrl.u32 %v895, 7
      %v897 = vsub.s32 0, %v896
      %v898 = vrot.slane %v893, %v897
      %v908 = vunpack.c.l.b16 %v869
      %v909 = vunpack.c.l.b16 %v870
      %v910 = vunpack.c.l.b16 %v871
      %v911 = vunpack.c.l.b16 %v872
      %v912 = vunpack.c.l.b16 %v873
      %v913 = vunpack.c.l.b16 %v874
      %v914 = vunpack.c.l.b16 %v875
      %v915 = vunpack.c.l.b16 %v876
      %vm916 = vcmask 1041409
      %v917 = vsel %vm916, %v909, %v908
      %vm918 = vcmask 1042434
      %v919 = vsel %vm918, %v910, %v917
      %vm920 = vcmask 1043459
      %v921 = vsel %vm920, %v911, %v919
      %vm922 = vcmask 1044484
      %v923 = vsel %vm922, %v912, %v921
      %vm924 = vcmask 1045509
      %v925 = vsel %vm924, %v913, %v923
      %vm926 = vcmask 1046534
      %v927 = vsel %vm926, %v914, %v925
      %vm928 = vcmask 1047559
      %v929 = vsel %vm928, %v915, %v927
      %v930 = vpack.c.b16 %v929, %v929
      %v948 = vunpack.c.l.b16 %v877
      %v949 = vunpack.c.l.b16 %v878
      %v950 = vunpack.c.l.b16 %v879
      %v951 = vunpack.c.l.b16 %v880
      %v952 = vunpack.c.l.b16 %v881
      %v953 = vunpack.c.l.b16 %v882
      %v954 = vunpack.c.l.b16 %v883
      %v955 = vunpack.c.l.b16 %v884
      %v956 = vunpack.c.l.b16 %v885
      %v957 = vunpack.c.l.b16 %v886
      %v958 = vunpack.c.l.b16 %v887
      %v959 = vunpack.c.l.b16 %v888
      %v960 = vunpack.c.l.b16 %v889
      %v961 = vunpack.c.l.b16 %v890
      %v962 = vunpack.c.l.b16 %v891
      %v963 = vunpack.c.l.b16 %v892
      %v964 = vpack.c.b16 %v949, %v948
      %v965 = vpack.c.b16 %v951, %v950
      %v966 = vpack.c.b16 %v953, %v952
      %v967 = vpack.c.b16 %v955, %v954
      %v968 = vpack.c.b16 %v957, %v956
      %v969 = vpack.c.b16 %v959, %v958
      %v970 = vpack.c.b16 %v961, %v960
      %v971 = vpack.c.b16 %v963, %v962
      %980 = vmatprep.subr.bf16.mxu0 0
      %981 = vmatpush1.bf16.msra.mxu0 %v964
      %982 = vmatprep.subr.bf16.mxu0 0
      %983 = vmatpush1.bf16.msra.mxu0 %v965
      %984 = vmatprep.subr.bf16.mxu0 0
      %985 = vmatpush1.bf16.msra.mxu0 %v966
      %986 = vmatprep.subr.bf16.mxu0 0
      %987 = vmatpush1.bf16.msra.mxu0 %v967
      %988 = vmatprep.subr.bf16.mxu0 0
      %989 = vmatpush1.bf16.msra.mxu0 %v968
      %990 = vmatprep.subr.bf16.mxu0 0
      %991 = vmatpush1.bf16.msra.mxu0 %v969
      %992 = vmatprep.subr.bf16.mxu0 0
      %993 = vmatpush1.bf16.msra.mxu0 %v970
      %994 = vmatprep.subr.bf16.mxu0 0
      %995 = vmatpush1.bf16.msra.mxu0 %v971
      %996 = vmatprep.subr.bf16.mxu0 0
      %997 = vmatpush1.bf16.msra.mxu0 0
      %998 = vmatprep.subr.bf16.mxu0 0
      %999 = vmatpush1.bf16.msra.mxu0 0
      %1000 = vmatprep.subr.bf16.mxu0 0
      %1001 = vmatpush1.bf16.msra.mxu0 0
      %1002 = vmatprep.subr.bf16.mxu0 0
      %1003 = vmatpush1.bf16.msra.mxu0 0
      %1004 = vmatprep.subr.bf16.mxu0 0
      %1005 = vmatpush1.bf16.msra.mxu0 0
      %1006 = vmatprep.subr.bf16.mxu0 0
      %1007 = vmatpush1.bf16.msra.mxu0 0
      %1008 = vmatprep.subr.bf16.mxu0 0
      %1009 = vmatpush1.bf16.msra.mxu0 0
      %1010 = vmatprep.subr.bf16.mxu0 0
      %1011 = vmatpush1.bf16.msra.mxu0 0
      %1012 = vmatprep.mubr.bf16.mxu0 0
      %1013 = vmatmul.mubr.bf16.gmra.mrb[0].mxu0 %v930
      %v1014 = vpop.f32.mrb[0].mxu0
      %v1015 = vadd.f32 %v898, %v1014
      %v1016 = vpop.f32.mrb[0].mxu0
      %v1017 = vpop.f32.mrb[0].mxu0
      %v1018 = vpop.f32.mrb[0].mxu0
      %1019 = vdwg.mxu0
      %1020 = vst [vmem:[%s254] sm:$0xff] %v1015
      %p1021 = scmp.lt.s32.totalorder %s17, 1
      %s1022 = scalar_select %p1021, %s17, 1
      %s1023 = smul.addr %s1022, 8
      %s1024 = scalar_lea.vmem %s6, %s1023
      // Predicated region
      $region45: #{_apply.1} parent=43 // pred_check
        %p1025 = pneg %p166
      $region46: #{_apply.1} parent=43 // pred_check_branch
        %1027 = sbr.rel (%p1025) target = $region48
      $region47: #{_apply.1} parent=43 // pred_region
        _
      $region48: #{_apply.1} parent=43 // pred_fallthru
        _
    $region44: #{_apply.1} parent=5 // pred_fallthru
      _
    %p1028 = scmp.le.s32.totalorder 2, %s12
    // Predicated region
    $region49: #{_apply.1} parent=5 // pred_check
      %p1029 = pneg %p1028
    $region50: #{_apply.1} parent=5 // pred_check_branch
      %1031 = sbr.rel (%p1029) target = $region52
    $region51: #{_apply.1} parent=5 // pred_region
      %s1032 = ssub.s32 %s12, 2
      // Predicated region
      $region53: #{_apply.1} parent=51 // pred_check
        %p1033 = pneg %p172
      $region54: #{_apply.1} parent=51 // pred_check_branch
        %1035 = sbr.rel (%p1033) target = $region56
      $region55: #{_apply.1} parent=51 // pred_region
        %p1036 = scmp.lt.s32.totalorder %s18, 1
        %s1037 = scalar_select %p1036, %s18, 1
        %s1038 = smul.addr %s1037, 8
        %s1039 = scalar_lea.vmem %s6, %s1038
      $region56: #{_apply.1} parent=51 // pred_fallthru
        _
    $region52: #{_apply.1} parent=5 // pred_fallthru
      _
  $region6: #{_apply.1} parent=0 // loop_footer
    %s16 = sadd.s32 1, %s12
  $region7: #{_apply.1} parent=0 // loop_footer_branch
    %11 = sbr.rel target = $region3
  $region8: #{_apply.1} parent=0 // loop_exit
    _

</llo_original>
